<compile_context>
chip_gen: v5e
topology: v5e:2x2
jax: 0.10.0
libtpu: 0.0.40
codegen_flags: <defaults>
</compile_context>

<pallas_src>
import jax
import jax.numpy as jnp
from jax.experimental import pallas as pl
from jax.experimental.pallas import tpu as pltpu

# ----- small synthetic RoBERTa config (roberta-base shapes scaled down) -----
VOCAB = 100
HIDDEN = 32
N_HEADS = 4
HEAD_DIM = HIDDEN // N_HEADS
N_LAYERS = 2
INTERMEDIATE = 64
MAX_POS = 64
PAD_ID = 1
LN_EPS = 1e-5
NEG_INF = -1e9
ATT_SCALE = 1.0 / (HEAD_DIM ** 0.5)
CLS_PAD = 128  # classifier output padded to a lane-dense width; real logits are [:, :2]


# ---------------- fused encoder + pooler + classifier kernel ----------------
def _encoder_kernel(
    emb_ref, bias_ref,                      # per-sample activations / mask
    embg_ref, embb_ref,                     # embedding LayerNorm
    wqkv_ref, bqkv_ref, wo_ref, bo_ref,     # attention (stacked over layers)
    ln1g_ref, ln1b_ref,
    w1_ref, b1_ref, w2_ref, b2_ref,         # FFN (stacked over layers)
    ln2g_ref, ln2b_ref,
    poolw_ref, poolb_ref, clsw_ref, clsb_ref,
    out_ref,
):
    def layer_norm(h, g, b):
        mu = jnp.mean(h, axis=-1, keepdims=True)
        var = jnp.mean(jnp.square(h - mu), axis=-1, keepdims=True)
        return (h - mu) * jax.lax.rsqrt(var + LN_EPS) * g + b

    def dense(a, w, b):
        # bf16 MXU matmul with f32 accumulation + f32 bias.
        return jnp.dot(a.astype(jnp.bfloat16), w,
                       preferred_element_type=jnp.float32) + b

    x = emb_ref[0].astype(jnp.float32)       # (S, H)
    bias = bias_ref[0]                       # (1, S) additive key-padding mask

    x = layer_norm(x, embg_ref[...], embb_ref[...])

    for l in range(N_LAYERS):                # static unroll (N_LAYERS = 2)
        # ---- self attention: fused QKV projection, per-head lane slices ----
        qkv = dense(x, wqkv_ref[l], bqkv_ref[l])             # (S, 3H)
        heads = []
        for h in range(N_HEADS):
            lo = h * HEAD_DIM
            q = qkv[:, lo:lo + HEAD_DIM]                     # (S, Dh)
            k = qkv[:, HIDDEN + lo:HIDDEN + lo + HEAD_DIM]   # (S, Dh)
            v = qkv[:, 2 * HIDDEN + lo:2 * HIDDEN + lo + HEAD_DIM]
            # q @ k^T without an explicit transpose (contract last dims).
            s = jax.lax.dot_general(q, k, (((1,), (1,)), ((), ())),
                                    preferred_element_type=jnp.float32)
            s = s * ATT_SCALE + bias                         # (S, S)
            m = jnp.max(s, axis=-1, keepdims=True)
            p = jnp.exp(s - m)
            p = p / jnp.sum(p, axis=-1, keepdims=True)
            heads.append(jnp.dot(p, v, preferred_element_type=jnp.float32))
        ctx = jnp.concatenate(heads, axis=-1)                # (S, H)

        attn_out = dense(ctx, wo_ref[l], bo_ref[l])
        x = layer_norm(attn_out + x, ln1g_ref[l], ln1b_ref[l])

        # ---- feed-forward ----
        ffn = dense(x, w1_ref[l], b1_ref[l])
        # NOTE: HF RoBERTa uses exact (erf) GELU; tanh approximation is used
        # here for robust Mosaic lowering (numerically ~1e-3 close).
        ffn = jax.nn.gelu(ffn, approximate=True)
        ffn = dense(ffn, w2_ref[l], b2_ref[l])
        x = layer_norm(ffn + x, ln2g_ref[l], ln2b_ref[l])

    # ---- pooler (tanh over [CLS]) + classifier head (padded to 128 lanes) ----
    cls_tok = x[0:1, :]                                      # (1, H)
    pooled = jnp.tanh(dense(cls_tok, poolw_ref[...], poolb_ref[...]))
    logits = dense(pooled, clsw_ref[...], clsb_ref[...])     # (1, CLS_PAD)
    out_ref[...] = logits.reshape(1, 1, CLS_PAD).astype(out_ref.dtype)


# ---------------- parameters ----------------
def init_params(key):
    keys = iter(jax.random.split(key, 32))

    def w(shape, scale=0.02):
        return scale * jax.random.normal(next(keys), shape, jnp.float32)

    L = N_LAYERS
    return {
        "word_emb": w((VOCAB, HIDDEN)),
        "pos_emb": w((MAX_POS, HIDDEN)),
        "type_emb": w((1, HIDDEN)),
        "emb_ln_g": jnp.ones((1, HIDDEN), jnp.float32),
        "emb_ln_b": jnp.zeros((1, HIDDEN), jnp.float32),
        # per-layer weights stacked along a leading layer axis
        "wqkv": w((L, HIDDEN, 3 * HIDDEN)),
        "bqkv": jnp.zeros((L, 1, 3 * HIDDEN), jnp.float32),
        "wo": w((L, HIDDEN, HIDDEN)),
        "bo": jnp.zeros((L, 1, HIDDEN), jnp.float32),
        "ln1_g": jnp.ones((L, 1, HIDDEN), jnp.float32),
        "ln1_b": jnp.zeros((L, 1, HIDDEN), jnp.float32),
        "w1": w((L, HIDDEN, INTERMEDIATE)),
        "b1": jnp.zeros((L, 1, INTERMEDIATE), jnp.float32),
        "w2": w((L, INTERMEDIATE, HIDDEN)),
        "b2": jnp.zeros((L, 1, HIDDEN), jnp.float32),
        "ln2_g": jnp.ones((L, 1, HIDDEN), jnp.float32),
        "ln2_b": jnp.zeros((L, 1, HIDDEN), jnp.float32),
        "pooler_w": w((HIDDEN, HIDDEN)),
        "pooler_b": jnp.zeros((1, HIDDEN), jnp.float32),
        "cls_w": w((HIDDEN, 2)),
        "cls_b": jnp.zeros((1, 2), jnp.float32),
    }


# ---------------- forward (RobertaEasymixModel.forward) ----------------
def roberta_easymix_forward(params, input_ids, attention_mask):
    B, S = input_ids.shape

    # RoBERTa position ids: cumsum over non-pad tokens, offset by padding_idx.
    pad_mask = (input_ids != PAD_ID).astype(jnp.int32)
    position_ids = jnp.cumsum(pad_mask, axis=1) * pad_mask + PAD_ID

    emb = (jnp.take(params["word_emb"], input_ids, axis=0)
           + jnp.take(params["pos_emb"], position_ids, axis=0)
           + params["type_emb"][0][None, None, :])                  # (B, S, H)

    # additive key-padding mask, broadcast over heads & query positions
    attn_bias = ((1.0 - attention_mask.astype(jnp.float32)) * NEG_INF)[:, None, :]  # (B,1,S)

    # classifier padded to 128 output lanes (lane-dense stores); sliced below.
    cls_w = jnp.zeros((HIDDEN, CLS_PAD), jnp.float32).at[:, :2].set(params["cls_w"])
    cls_b = jnp.zeros((1, CLS_PAD), jnp.float32).at[:, :2].set(params["cls_b"])

    bf = lambda a: a.astype(jnp.bfloat16)   # bf16 at the HBM boundary (f32 accumulate)

    args = (
        bf(emb), attn_bias,
        params["emb_ln_g"], params["emb_ln_b"],
        bf(params["wqkv"]), params["bqkv"],
        bf(params["wo"]), params["bo"],
        params["ln1_g"], params["ln1_b"],
        bf(params["w1"]), params["b1"],
        bf(params["w2"]), params["b2"],
        params["ln2_g"], params["ln2_b"],
        bf(params["pooler_w"]), params["pooler_b"],
        bf(cls_w), cls_b,
    )

    in_specs = [
        pl.BlockSpec((1, S, HIDDEN), lambda b: (b, 0, 0)),   # per-sample embeddings
        pl.BlockSpec((1, 1, S), lambda b: (b, 0, 0)),        # per-sample mask bias
    ] + [
        # all weights: full-array blocks, resident in VMEM every grid step
        pl.BlockSpec(a.shape, lambda b, nd=a.ndim: (0,) * nd)
        for a in args[2:]
    ]

    out = pl.pallas_call(
        _encoder_kernel,
        out_shape=jax.ShapeDtypeStruct((B, 1, CLS_PAD), jnp.float32),
        grid=(B,),
        in_specs=in_specs,
        out_specs=pl.BlockSpec((1, 1, CLS_PAD), lambda b: (b, 0, 0)),
        compiler_params=pltpu.CompilerParams(
            # batch axis parallel -> shards across v7x's two TensorCores.
            dimension_semantics=("parallel",),
            # TODO(synk): if scaled to roberta-base (H=768, S=512), set
            # vmem_limit_bytes explicitly and re-budget the fused-layer tiles.
        ),
    )(*args)

    return out.reshape(B, CLS_PAD)[:, :2]


if __name__ == "__main__":
    key = jax.random.PRNGKey(0)
    pkey, dkey = jax.random.split(key)
    params = init_params(pkey)

    B, S = 2, 8
    input_ids = jax.random.randint(dkey, (B, S), 2, VOCAB, dtype=jnp.int32)
    attention_mask = jnp.ones((B, S), dtype=jnp.int32)
    # second example is shorter: pad + mask the tail
    input_ids = input_ids.at[1, 6:].set(PAD_ID)
    attention_mask = attention_mask.at[1, 6:].set(0)

    logits = jax.jit(lambda i, m: roberta_easymix_forward(params, i, m))(
        input_ids, attention_mask)
    jax.block_until_ready(logits)
    assert logits.shape == (B, 2) and logits.dtype == jnp.float32
    print("KERNEL_OK")
</pallas_src>

<mosaic_0001>
module attributes {stable_mosaic.version = 11 : i64} {
  func.func @_encoder_kernel(%arg0: i32, %arg1: memref<1x8x32xbf16, #tpu.memory_space<vmem>>, %arg2: memref<1x1x8xf32, #tpu.memory_space<vmem>>, %arg3: memref<1x32xf32, #tpu.memory_space<vmem>>, %arg4: memref<1x32xf32, #tpu.memory_space<vmem>>, %arg5: memref<2x32x96xbf16, #tpu.memory_space<vmem>>, %arg6: memref<2x1x96xf32, #tpu.memory_space<vmem>>, %arg7: memref<2x32x32xbf16, #tpu.memory_space<vmem>>, %arg8: memref<2x1x32xf32, #tpu.memory_space<vmem>>, %arg9: memref<2x1x32xf32, #tpu.memory_space<vmem>>, %arg10: memref<2x1x32xf32, #tpu.memory_space<vmem>>, %arg11: memref<2x32x64xbf16, #tpu.memory_space<vmem>>, %arg12: memref<2x1x64xf32, #tpu.memory_space<vmem>>, %arg13: memref<2x64x32xbf16, #tpu.memory_space<vmem>>, %arg14: memref<2x1x32xf32, #tpu.memory_space<vmem>>, %arg15: memref<2x1x32xf32, #tpu.memory_space<vmem>>, %arg16: memref<2x1x32xf32, #tpu.memory_space<vmem>>, %arg17: memref<32x32xbf16, #tpu.memory_space<vmem>>, %arg18: memref<1x32xf32, #tpu.memory_space<vmem>>, %arg19: memref<32x128xbf16, #tpu.memory_space<vmem>>, %arg20: memref<1x128xf32, #tpu.memory_space<vmem>>, %arg21: memref<1x1x128xf32, #tpu.memory_space<vmem>>) attributes {dimension_semantics = [#tpu.dimension_semantics<parallel>], iteration_bounds = array<i64: 2>, scalar_prefetch = 0 : i64, scratch_operands = 0 : i64, tpu.core_type = #tpu.core_type<tc>, window_params = [{transform_indices = @transform_0, window_bounds = array<i64: 1, 8, 32>}, {transform_indices = @transform_1, window_bounds = array<i64: 1, 1, 8>}, {pipeline_mode = #tpu.pipeline_mode<synchronous>, transform_indices = @transform_2, window_bounds = array<i64: 1, 32>}, {pipeline_mode = #tpu.pipeline_mode<synchronous>, transform_indices = @transform_3, window_bounds = array<i64: 1, 32>}, {pipeline_mode = #tpu.pipeline_mode<synchronous>, transform_indices = @transform_4, window_bounds = array<i64: 2, 32, 96>}, {pipeline_mode = #tpu.pipeline_mode<synchronous>, transform_indices = @transform_5, window_bounds = array<i64: 2, 1, 96>}, {pipeline_mode = #tpu.pipeline_mode<synchronous>, transform_indices = @transform_6, window_bounds = array<i64: 2, 32, 32>}, {pipeline_mode = #tpu.pipeline_mode<synchronous>, transform_indices = @transform_7, window_bounds = array<i64: 2, 1, 32>}, {pipeline_mode = #tpu.pipeline_mode<synchronous>, transform_indices = @transform_8, window_bounds = array<i64: 2, 1, 32>}, {pipeline_mode = #tpu.pipeline_mode<synchronous>, transform_indices = @transform_9, window_bounds = array<i64: 2, 1, 32>}, {pipeline_mode = #tpu.pipeline_mode<synchronous>, transform_indices = @transform_10, window_bounds = array<i64: 2, 32, 64>}, {pipeline_mode = #tpu.pipeline_mode<synchronous>, transform_indices = @transform_11, window_bounds = array<i64: 2, 1, 64>}, {pipeline_mode = #tpu.pipeline_mode<synchronous>, transform_indices = @transform_12, window_bounds = array<i64: 2, 64, 32>}, {pipeline_mode = #tpu.pipeline_mode<synchronous>, transform_indices = @transform_13, window_bounds = array<i64: 2, 1, 32>}, {pipeline_mode = #tpu.pipeline_mode<synchronous>, transform_indices = @transform_14, window_bounds = array<i64: 2, 1, 32>}, {pipeline_mode = #tpu.pipeline_mode<synchronous>, transform_indices = @transform_15, window_bounds = array<i64: 2, 1, 32>}, {pipeline_mode = #tpu.pipeline_mode<synchronous>, transform_indices = @transform_16, window_bounds = array<i64: 32, 32>}, {pipeline_mode = #tpu.pipeline_mode<synchronous>, transform_indices = @transform_17, window_bounds = array<i64: 1, 32>}, {pipeline_mode = #tpu.pipeline_mode<synchronous>, transform_indices = @transform_18, window_bounds = array<i64: 32, 128>}, {pipeline_mode = #tpu.pipeline_mode<synchronous>, transform_indices = @transform_19, window_bounds = array<i64: 1, 128>}, {transform_indices = @transform_20, window_bounds = array<i64: 1, 1, 128>}]} {
    %c0 = arith.constant 0 : index
    %c0_0 = arith.constant 0 : index
    %c0_1 = arith.constant 0 : index
    %0 = vector.load %arg1[%c0, %c0_0, %c0_1] : memref<1x8x32xbf16, #tpu.memory_space<vmem>>, vector<1x8x32xbf16>
    %1 = vector.shape_cast %0 : vector<1x8x32xbf16> to vector<8x32xbf16>
    %2 = arith.extf %1 : vector<8x32xbf16> to vector<8x32xf32>
    %c0_2 = arith.constant 0 : index
    %c0_3 = arith.constant 0 : index
    %c0_4 = arith.constant 0 : index
    %3 = vector.load %arg2[%c0_2, %c0_3, %c0_4] : memref<1x1x8xf32, #tpu.memory_space<vmem>>, vector<1x1x8xf32>
    %4 = vector.shape_cast %3 : vector<1x1x8xf32> to vector<1x8xf32>
    %c0_5 = arith.constant 0 : index
    %c0_6 = arith.constant 0 : index
    %5 = vector.load %arg3[%c0_5, %c0_6] : memref<1x32xf32, #tpu.memory_space<vmem>>, vector<1x32xf32>
    %c0_7 = arith.constant 0 : index
    %c0_8 = arith.constant 0 : index
    %6 = vector.load %arg4[%c0_7, %c0_8] : memref<1x32xf32, #tpu.memory_space<vmem>>, vector<1x32xf32>
    %cst = arith.constant dense<0.000000e+00> : vector<8xf32>
    %7 = vector.multi_reduction <add>, %2, %cst [1] : vector<8x32xf32> to vector<8xf32>
    %8 = vector.shape_cast %7 : vector<8xf32> to vector<8x1xf32>
    %cst_9 = arith.constant 3.200000e+01 : f32
    %9 = vector.broadcast %cst_9 : f32 to vector<8x1xf32>
    %10 = arith.divf %8, %9 : vector<8x1xf32>
    %11 = vector.broadcast %10 : vector<8x1xf32> to vector<8x32xf32>
    %12 = arith.subf %2, %11 : vector<8x32xf32>
    %13 = arith.mulf %12, %12 : vector<8x32xf32>
    %cst_10 = arith.constant dense<0.000000e+00> : vector<8xf32>
    %14 = vector.multi_reduction <add>, %13, %cst_10 [1] : vector<8x32xf32> to vector<8xf32>
    %15 = vector.shape_cast %14 : vector<8xf32> to vector<8x1xf32>
    %cst_11 = arith.constant 3.200000e+01 : f32
    %16 = vector.broadcast %cst_11 : f32 to vector<8x1xf32>
    %17 = arith.divf %15, %16 : vector<8x1xf32>
    %18 = vector.broadcast %10 : vector<8x1xf32> to vector<8x32xf32>
    %19 = arith.subf %2, %18 : vector<8x32xf32>
    %cst_12 = arith.constant 9.99999974E-6 : f32
    %20 = vector.broadcast %cst_12 : f32 to vector<8x1xf32>
    %21 = arith.addf %17, %20 : vector<8x1xf32>
    %22 = math.rsqrt %21 : vector<8x1xf32>
    %23 = vector.broadcast %22 : vector<8x1xf32> to vector<8x32xf32>
    %24 = arith.mulf %19, %23 : vector<8x32xf32>
    %25 = vector.broadcast %5 : vector<1x32xf32> to vector<8x32xf32>
    %26 = arith.mulf %24, %25 : vector<8x32xf32>
    %27 = vector.broadcast %6 : vector<1x32xf32> to vector<8x32xf32>
    %28 = arith.addf %26, %27 : vector<8x32xf32>
    %c0_13 = arith.constant 0 : index
    %c0_14 = arith.constant 0 : index
    %c0_15 = arith.constant 0 : index
    %29 = vector.load %arg5[%c0_13, %c0_14, %c0_15] : memref<2x32x96xbf16, #tpu.memory_space<vmem>>, vector<1x32x96xbf16>
    %30 = vector.shape_cast %29 : vector<1x32x96xbf16> to vector<32x96xbf16>
    %c0_16 = arith.constant 0 : index
    %c0_17 = arith.constant 0 : index
    %c0_18 = arith.constant 0 : index
    %31 = vector.load %arg6[%c0_16, %c0_17, %c0_18] : memref<2x1x96xf32, #tpu.memory_space<vmem>>, vector<1x1x96xf32>
    %32 = vector.shape_cast %31 : vector<1x1x96xf32> to vector<1x96xf32>
    %33 = arith.truncf %28 : vector<8x32xf32> to vector<8x32xbf16>
    %cst_19 = arith.constant dense<0.000000e+00> : vector<8x96xf32>
    %34 = tpu.matmul %33, %30, %cst_19 {dimension_numbers = #tpu.dot_dimension_numbers<[1], [0], [0], [1], [0, 0, 1, 1], [], []>} : vector<8x32xbf16>, vector<32x96xbf16>, vector<8x96xf32> -> vector<8x96xf32>
    %35 = vector.broadcast %32 : vector<1x96xf32> to vector<8x96xf32>
    %36 = arith.addf %34, %35 : vector<8x96xf32>
    %37 = vector.extract_strided_slice %36 {offsets = [0, 0], sizes = [8, 8], strides = [1, 1]} : vector<8x96xf32> to vector<8x8xf32>
    %38 = vector.extract_strided_slice %36 {offsets = [0, 32], sizes = [8, 8], strides = [1, 1]} : vector<8x96xf32> to vector<8x8xf32>
    %39 = vector.extract_strided_slice %36 {offsets = [0, 64], sizes = [8, 8], strides = [1, 1]} : vector<8x96xf32> to vector<8x8xf32>
    %cst_20 = arith.constant dense<0.000000e+00> : vector<8x8xf32>
    %40 = tpu.matmul %37, %38, %cst_20 {dimension_numbers = #tpu.dot_dimension_numbers<[1], [1], [0], [0], [0, 0, 1, 0], [], []>} : vector<8x8xf32>, vector<8x8xf32>, vector<8x8xf32> -> vector<8x8xf32>
    %cst_21 = arith.constant 0.353553385 : f32
    %41 = vector.broadcast %cst_21 : f32 to vector<8x8xf32>
    %42 = arith.mulf %40, %41 : vector<8x8xf32>
    %43 = vector.broadcast %4 : vector<1x8xf32> to vector<8x8xf32>
    %44 = arith.addf %42, %43 : vector<8x8xf32>
    %cst_22 = arith.constant dense<0xFF800000> : vector<8xf32>
    %45 = vector.multi_reduction <maximumf>, %44, %cst_22 [1] : vector<8x8xf32> to vector<8xf32>
    %46 = vector.shape_cast %45 : vector<8xf32> to vector<8x1xf32>
    %47 = vector.broadcast %46 : vector<8x1xf32> to vector<8x8xf32>
    %48 = arith.subf %44, %47 : vector<8x8xf32>
    %49 = math.exp %48 : vector<8x8xf32>
    %cst_23 = arith.constant dense<0.000000e+00> : vector<8xf32>
    %50 = vector.multi_reduction <add>, %49, %cst_23 [1] : vector<8x8xf32> to vector<8xf32>
    %51 = vector.shape_cast %50 : vector<8xf32> to vector<8x1xf32>
    %52 = vector.broadcast %51 : vector<8x1xf32> to vector<8x8xf32>
    %53 = arith.divf %49, %52 : vector<8x8xf32>
    %cst_24 = arith.constant dense<0.000000e+00> : vector<8x8xf32>
    %54 = tpu.matmul %53, %39, %cst_24 {dimension_numbers = #tpu.dot_dimension_numbers<[1], [0], [0], [1], [0, 0, 1, 1], [], []>} : vector<8x8xf32>, vector<8x8xf32>, vector<8x8xf32> -> vector<8x8xf32>
    %55 = vector.extract_strided_slice %36 {offsets = [0, 8], sizes = [8, 8], strides = [1, 1]} : vector<8x96xf32> to vector<8x8xf32>
    %56 = vector.extract_strided_slice %36 {offsets = [0, 40], sizes = [8, 8], strides = [1, 1]} : vector<8x96xf32> to vector<8x8xf32>
    %57 = vector.extract_strided_slice %36 {offsets = [0, 72], sizes = [8, 8], strides = [1, 1]} : vector<8x96xf32> to vector<8x8xf32>
    %cst_25 = arith.constant dense<0.000000e+00> : vector<8x8xf32>
    %58 = tpu.matmul %55, %56, %cst_25 {dimension_numbers = #tpu.dot_dimension_numbers<[1], [1], [0], [0], [0, 0, 1, 0], [], []>} : vector<8x8xf32>, vector<8x8xf32>, vector<8x8xf32> -> vector<8x8xf32>
    %cst_26 = arith.constant 0.353553385 : f32
    %59 = vector.broadcast %cst_26 : f32 to vector<8x8xf32>
    %60 = arith.mulf %58, %59 : vector<8x8xf32>
    %61 = vector.broadcast %4 : vector<1x8xf32> to vector<8x8xf32>
    %62 = arith.addf %60, %61 : vector<8x8xf32>
    %cst_27 = arith.constant dense<0xFF800000> : vector<8xf32>
    %63 = vector.multi_reduction <maximumf>, %62, %cst_27 [1] : vector<8x8xf32> to vector<8xf32>
    %64 = vector.shape_cast %63 : vector<8xf32> to vector<8x1xf32>
    %65 = vector.broadcast %64 : vector<8x1xf32> to vector<8x8xf32>
    %66 = arith.subf %62, %65 : vector<8x8xf32>
    %67 = math.exp %66 : vector<8x8xf32>
    %cst_28 = arith.constant dense<0.000000e+00> : vector<8xf32>
    %68 = vector.multi_reduction <add>, %67, %cst_28 [1] : vector<8x8xf32> to vector<8xf32>
    %69 = vector.shape_cast %68 : vector<8xf32> to vector<8x1xf32>
    %70 = vector.broadcast %69 : vector<8x1xf32> to vector<8x8xf32>
    %71 = arith.divf %67, %70 : vector<8x8xf32>
    %cst_29 = arith.constant dense<0.000000e+00> : vector<8x8xf32>
    %72 = tpu.matmul %71, %57, %cst_29 {dimension_numbers = #tpu.dot_dimension_numbers<[1], [0], [0], [1], [0, 0, 1, 1], [], []>} : vector<8x8xf32>, vector<8x8xf32>, vector<8x8xf32> -> vector<8x8xf32>
    %73 = vector.extract_strided_slice %36 {offsets = [0, 16], sizes = [8, 8], strides = [1, 1]} : vector<8x96xf32> to vector<8x8xf32>
    %74 = vector.extract_strided_slice %36 {offsets = [0, 48], sizes = [8, 8], strides = [1, 1]} : vector<8x96xf32> to vector<8x8xf32>
    %75 = vector.extract_strided_slice %36 {offsets = [0, 80], sizes = [8, 8], strides = [1, 1]} : vector<8x96xf32> to vector<8x8xf32>
    %cst_30 = arith.constant dense<0.000000e+00> : vector<8x8xf32>
    %76 = tpu.matmul %73, %74, %cst_30 {dimension_numbers = #tpu.dot_dimension_numbers<[1], [1], [0], [0], [0, 0, 1, 0], [], []>} : vector<8x8xf32>, vector<8x8xf32>, vector<8x8xf32> -> vector<8x8xf32>
    %cst_31 = arith.constant 0.353553385 : f32
    %77 = vector.broadcast %cst_31 : f32 to vector<8x8xf32>
    %78 = arith.mulf %76, %77 : vector<8x8xf32>
    %79 = vector.broadcast %4 : vector<1x8xf32> to vector<8x8xf32>
    %80 = arith.addf %78, %79 : vector<8x8xf32>
    %cst_32 = arith.constant dense<0xFF800000> : vector<8xf32>
    %81 = vector.multi_reduction <maximumf>, %80, %cst_32 [1] : vector<8x8xf32> to vector<8xf32>
    %82 = vector.shape_cast %81 : vector<8xf32> to vector<8x1xf32>
    %83 = vector.broadcast %82 : vector<8x1xf32> to vector<8x8xf32>
    %84 = arith.subf %80, %83 : vector<8x8xf32>
    %85 = math.exp %84 : vector<8x8xf32>
    %cst_33 = arith.constant dense<0.000000e+00> : vector<8xf32>
    %86 = vector.multi_reduction <add>, %85, %cst_33 [1] : vector<8x8xf32> to vector<8xf32>
    %87 = vector.shape_cast %86 : vector<8xf32> to vector<8x1xf32>
    %88 = vector.broadcast %87 : vector<8x1xf32> to vector<8x8xf32>
    %89 = arith.divf %85, %88 : vector<8x8xf32>
    %cst_34 = arith.constant dense<0.000000e+00> : vector<8x8xf32>
    %90 = tpu.matmul %89, %75, %cst_34 {dimension_numbers = #tpu.dot_dimension_numbers<[1], [0], [0], [1], [0, 0, 1, 1], [], []>} : vector<8x8xf32>, vector<8x8xf32>, vector<8x8xf32> -> vector<8x8xf32>
    %91 = vector.extract_strided_slice %36 {offsets = [0, 24], sizes = [8, 8], strides = [1, 1]} : vector<8x96xf32> to vector<8x8xf32>
    %92 = vector.extract_strided_slice %36 {offsets = [0, 56], sizes = [8, 8], strides = [1, 1]} : vector<8x96xf32> to vector<8x8xf32>
    %93 = vector.extract_strided_slice %36 {offsets = [0, 88], sizes = [8, 8], strides = [1, 1]} : vector<8x96xf32> to vector<8x8xf32>
    %cst_35 = arith.constant dense<0.000000e+00> : vector<8x8xf32>
    %94 = tpu.matmul %91, %92, %cst_35 {dimension_numbers = #tpu.dot_dimension_numbers<[1], [1], [0], [0], [0, 0, 1, 0], [], []>} : vector<8x8xf32>, vector<8x8xf32>, vector<8x8xf32> -> vector<8x8xf32>
    %cst_36 = arith.constant 0.353553385 : f32
    %95 = vector.broadcast %cst_36 : f32 to vector<8x8xf32>
    %96 = arith.mulf %94, %95 : vector<8x8xf32>
    %97 = vector.broadcast %4 : vector<1x8xf32> to vector<8x8xf32>
    %98 = arith.addf %96, %97 : vector<8x8xf32>
    %cst_37 = arith.constant dense<0xFF800000> : vector<8xf32>
    %99 = vector.multi_reduction <maximumf>, %98, %cst_37 [1] : vector<8x8xf32> to vector<8xf32>
    %100 = vector.shape_cast %99 : vector<8xf32> to vector<8x1xf32>
    %101 = vector.broadcast %100 : vector<8x1xf32> to vector<8x8xf32>
    %102 = arith.subf %98, %101 : vector<8x8xf32>
    %103 = math.exp %102 : vector<8x8xf32>
    %cst_38 = arith.constant dense<0.000000e+00> : vector<8xf32>
    %104 = vector.multi_reduction <add>, %103, %cst_38 [1] : vector<8x8xf32> to vector<8xf32>
    %105 = vector.shape_cast %104 : vector<8xf32> to vector<8x1xf32>
    %106 = vector.broadcast %105 : vector<8x1xf32> to vector<8x8xf32>
    %107 = arith.divf %103, %106 : vector<8x8xf32>
    %cst_39 = arith.constant dense<0.000000e+00> : vector<8x8xf32>
    %108 = tpu.matmul %107, %93, %cst_39 {dimension_numbers = #tpu.dot_dimension_numbers<[1], [0], [0], [1], [0, 0, 1, 1], [], []>} : vector<8x8xf32>, vector<8x8xf32>, vector<8x8xf32> -> vector<8x8xf32>
    %109 = tpu.concatenate %54, %72, %90, %108 in 1 : vector<8x8xf32>, vector<8x8xf32>, vector<8x8xf32>, vector<8x8xf32> -> vector<8x32xf32>
    %c0_40 = arith.constant 0 : index
    %c0_41 = arith.constant 0 : index
    %c0_42 = arith.constant 0 : index
    %110 = vector.load %arg7[%c0_40, %c0_41, %c0_42] : memref<2x32x32xbf16, #tpu.memory_space<vmem>>, vector<1x32x32xbf16>
    %111 = vector.shape_cast %110 : vector<1x32x32xbf16> to vector<32x32xbf16>
    %c0_43 = arith.constant 0 : index
    %c0_44 = arith.constant 0 : index
    %c0_45 = arith.constant 0 : index
    %112 = vector.load %arg8[%c0_43, %c0_44, %c0_45] : memref<2x1x32xf32, #tpu.memory_space<vmem>>, vector<1x1x32xf32>
    %113 = vector.shape_cast %112 : vector<1x1x32xf32> to vector<1x32xf32>
    %114 = arith.truncf %109 : vector<8x32xf32> to vector<8x32xbf16>
    %cst_46 = arith.constant dense<0.000000e+00> : vector<8x32xf32>
    %115 = tpu.matmul %114, %111, %cst_46 {dimension_numbers = #tpu.dot_dimension_numbers<[1], [0], [0], [1], [0, 0, 1, 1], [], []>} : vector<8x32xbf16>, vector<32x32xbf16>, vector<8x32xf32> -> vector<8x32xf32>
    %116 = vector.broadcast %113 : vector<1x32xf32> to vector<8x32xf32>
    %117 = arith.addf %115, %116 : vector<8x32xf32>
    %118 = arith.addf %117, %28 : vector<8x32xf32>
    %c0_47 = arith.constant 0 : index
    %c0_48 = arith.constant 0 : index
    %c0_49 = arith.constant 0 : index
    %119 = vector.load %arg9[%c0_47, %c0_48, %c0_49] : memref<2x1x32xf32, #tpu.memory_space<vmem>>, vector<1x1x32xf32>
    %120 = vector.shape_cast %119 : vector<1x1x32xf32> to vector<1x32xf32>
    %c0_50 = arith.constant 0 : index
    %c0_51 = arith.constant 0 : index
    %c0_52 = arith.constant 0 : index
    %121 = vector.load %arg10[%c0_50, %c0_51, %c0_52] : memref<2x1x32xf32, #tpu.memory_space<vmem>>, vector<1x1x32xf32>
    %122 = vector.shape_cast %121 : vector<1x1x32xf32> to vector<1x32xf32>
    %cst_53 = arith.constant dense<0.000000e+00> : vector<8xf32>
    %123 = vector.multi_reduction <add>, %118, %cst_53 [1] : vector<8x32xf32> to vector<8xf32>
    %124 = vector.shape_cast %123 : vector<8xf32> to vector<8x1xf32>
    %cst_54 = arith.constant 3.200000e+01 : f32
    %125 = vector.broadcast %cst_54 : f32 to vector<8x1xf32>
    %126 = arith.divf %124, %125 : vector<8x1xf32>
    %127 = vector.broadcast %126 : vector<8x1xf32> to vector<8x32xf32>
    %128 = arith.subf %118, %127 : vector<8x32xf32>
    %129 = arith.mulf %128, %128 : vector<8x32xf32>
    %cst_55 = arith.constant dense<0.000000e+00> : vector<8xf32>
    %130 = vector.multi_reduction <add>, %129, %cst_55 [1] : vector<8x32xf32> to vector<8xf32>
    %131 = vector.shape_cast %130 : vector<8xf32> to vector<8x1xf32>
    %cst_56 = arith.constant 3.200000e+01 : f32
    %132 = vector.broadcast %cst_56 : f32 to vector<8x1xf32>
    %133 = arith.divf %131, %132 : vector<8x1xf32>
    %134 = vector.broadcast %126 : vector<8x1xf32> to vector<8x32xf32>
    %135 = arith.subf %118, %134 : vector<8x32xf32>
    %cst_57 = arith.constant 9.99999974E-6 : f32
    %136 = vector.broadcast %cst_57 : f32 to vector<8x1xf32>
    %137 = arith.addf %133, %136 : vector<8x1xf32>
    %138 = math.rsqrt %137 : vector<8x1xf32>
    %139 = vector.broadcast %138 : vector<8x1xf32> to vector<8x32xf32>
    %140 = arith.mulf %135, %139 : vector<8x32xf32>
    %141 = vector.broadcast %120 : vector<1x32xf32> to vector<8x32xf32>
    %142 = arith.mulf %140, %141 : vector<8x32xf32>
    %143 = vector.broadcast %122 : vector<1x32xf32> to vector<8x32xf32>
    %144 = arith.addf %142, %143 : vector<8x32xf32>
    %c0_58 = arith.constant 0 : index
    %c0_59 = arith.constant 0 : index
    %c0_60 = arith.constant 0 : index
    %145 = vector.load %arg11[%c0_58, %c0_59, %c0_60] : memref<2x32x64xbf16, #tpu.memory_space<vmem>>, vector<1x32x64xbf16>
    %146 = vector.shape_cast %145 : vector<1x32x64xbf16> to vector<32x64xbf16>
    %c0_61 = arith.constant 0 : index
    %c0_62 = arith.constant 0 : index
    %c0_63 = arith.constant 0 : index
    %147 = vector.load %arg12[%c0_61, %c0_62, %c0_63] : memref<2x1x64xf32, #tpu.memory_space<vmem>>, vector<1x1x64xf32>
    %148 = vector.shape_cast %147 : vector<1x1x64xf32> to vector<1x64xf32>
    %149 = arith.truncf %144 : vector<8x32xf32> to vector<8x32xbf16>
    %cst_64 = arith.constant dense<0.000000e+00> : vector<8x64xf32>
    %150 = tpu.matmul %149, %146, %cst_64 {dimension_numbers = #tpu.dot_dimension_numbers<[1], [0], [0], [1], [0, 0, 1, 1], [], []>} : vector<8x32xbf16>, vector<32x64xbf16>, vector<8x64xf32> -> vector<8x64xf32>
    %151 = vector.broadcast %148 : vector<1x64xf32> to vector<8x64xf32>
    %152 = arith.addf %150, %151 : vector<8x64xf32>
    %153 = arith.mulf %152, %152 : vector<8x64xf32>
    %154 = arith.mulf %152, %153 : vector<8x64xf32>
    %cst_65 = arith.constant 4.471500e-02 : f32
    %155 = vector.broadcast %cst_65 : f32 to vector<8x64xf32>
    %156 = arith.mulf %155, %154 : vector<8x64xf32>
    %157 = arith.addf %152, %156 : vector<8x64xf32>
    %cst_66 = arith.constant 0.797884583 : f32
    %158 = vector.broadcast %cst_66 : f32 to vector<8x64xf32>
    %159 = arith.mulf %158, %157 : vector<8x64xf32>
    %160 = math.tanh %159 : vector<8x64xf32>
    %cst_67 = arith.constant 1.000000e+00 : f32
    %161 = vector.broadcast %cst_67 : f32 to vector<8x64xf32>
    %162 = arith.addf %161, %160 : vector<8x64xf32>
    %cst_68 = arith.constant 5.000000e-01 : f32
    %163 = vector.broadcast %cst_68 : f32 to vector<8x64xf32>
    %164 = arith.mulf %163, %162 : vector<8x64xf32>
    %165 = arith.mulf %152, %164 : vector<8x64xf32>
    %c0_69 = arith.constant 0 : index
    %c0_70 = arith.constant 0 : index
    %c0_71 = arith.constant 0 : index
    %166 = vector.load %arg13[%c0_69, %c0_70, %c0_71] : memref<2x64x32xbf16, #tpu.memory_space<vmem>>, vector<1x64x32xbf16>
    %167 = vector.shape_cast %166 : vector<1x64x32xbf16> to vector<64x32xbf16>
    %c0_72 = arith.constant 0 : index
    %c0_73 = arith.constant 0 : index
    %c0_74 = arith.constant 0 : index
    %168 = vector.load %arg14[%c0_72, %c0_73, %c0_74] : memref<2x1x32xf32, #tpu.memory_space<vmem>>, vector<1x1x32xf32>
    %169 = vector.shape_cast %168 : vector<1x1x32xf32> to vector<1x32xf32>
    %170 = arith.truncf %165 : vector<8x64xf32> to vector<8x64xbf16>
    %cst_75 = arith.constant dense<0.000000e+00> : vector<8x32xf32>
    %171 = tpu.matmul %170, %167, %cst_75 {dimension_numbers = #tpu.dot_dimension_numbers<[1], [0], [0], [1], [0, 0, 1, 1], [], []>} : vector<8x64xbf16>, vector<64x32xbf16>, vector<8x32xf32> -> vector<8x32xf32>
    %172 = vector.broadcast %169 : vector<1x32xf32> to vector<8x32xf32>
    %173 = arith.addf %171, %172 : vector<8x32xf32>
    %174 = arith.addf %173, %144 : vector<8x32xf32>
    %c0_76 = arith.constant 0 : index
    %c0_77 = arith.constant 0 : index
    %c0_78 = arith.constant 0 : index
    %175 = vector.load %arg15[%c0_76, %c0_77, %c0_78] : memref<2x1x32xf32, #tpu.memory_space<vmem>>, vector<1x1x32xf32>
    %176 = vector.shape_cast %175 : vector<1x1x32xf32> to vector<1x32xf32>
    %c0_79 = arith.constant 0 : index
    %c0_80 = arith.constant 0 : index
    %c0_81 = arith.constant 0 : index
    %177 = vector.load %arg16[%c0_79, %c0_80, %c0_81] : memref<2x1x32xf32, #tpu.memory_space<vmem>>, vector<1x1x32xf32>
    %178 = vector.shape_cast %177 : vector<1x1x32xf32> to vector<1x32xf32>
    %cst_82 = arith.constant dense<0.000000e+00> : vector<8xf32>
    %179 = vector.multi_reduction <add>, %174, %cst_82 [1] : vector<8x32xf32> to vector<8xf32>
    %180 = vector.shape_cast %179 : vector<8xf32> to vector<8x1xf32>
    %cst_83 = arith.constant 3.200000e+01 : f32
    %181 = vector.broadcast %cst_83 : f32 to vector<8x1xf32>
    %182 = arith.divf %180, %181 : vector<8x1xf32>
    %183 = vector.broadcast %182 : vector<8x1xf32> to vector<8x32xf32>
    %184 = arith.subf %174, %183 : vector<8x32xf32>
    %185 = arith.mulf %184, %184 : vector<8x32xf32>
    %cst_84 = arith.constant dense<0.000000e+00> : vector<8xf32>
    %186 = vector.multi_reduction <add>, %185, %cst_84 [1] : vector<8x32xf32> to vector<8xf32>
    %187 = vector.shape_cast %186 : vector<8xf32> to vector<8x1xf32>
    %cst_85 = arith.constant 3.200000e+01 : f32
    %188 = vector.broadcast %cst_85 : f32 to vector<8x1xf32>
    %189 = arith.divf %187, %188 : vector<8x1xf32>
    %190 = vector.broadcast %182 : vector<8x1xf32> to vector<8x32xf32>
    %191 = arith.subf %174, %190 : vector<8x32xf32>
    %cst_86 = arith.constant 9.99999974E-6 : f32
    %192 = vector.broadcast %cst_86 : f32 to vector<8x1xf32>
    %193 = arith.addf %189, %192 : vector<8x1xf32>
    %194 = math.rsqrt %193 : vector<8x1xf32>
    %195 = vector.broadcast %194 : vector<8x1xf32> to vector<8x32xf32>
    %196 = arith.mulf %191, %195 : vector<8x32xf32>
    %197 = vector.broadcast %176 : vector<1x32xf32> to vector<8x32xf32>
    %198 = arith.mulf %196, %197 : vector<8x32xf32>
    %199 = vector.broadcast %178 : vector<1x32xf32> to vector<8x32xf32>
    %200 = arith.addf %198, %199 : vector<8x32xf32>
    %c1 = arith.constant 1 : index
    %c0_87 = arith.constant 0 : index
    %c0_88 = arith.constant 0 : index
    %201 = vector.load %arg5[%c1, %c0_87, %c0_88] : memref<2x32x96xbf16, #tpu.memory_space<vmem>>, vector<1x32x96xbf16>
    %202 = vector.shape_cast %201 : vector<1x32x96xbf16> to vector<32x96xbf16>
    %c1_89 = arith.constant 1 : index
    %c0_90 = arith.constant 0 : index
    %c0_91 = arith.constant 0 : index
    %203 = vector.load %arg6[%c1_89, %c0_90, %c0_91] : memref<2x1x96xf32, #tpu.memory_space<vmem>>, vector<1x1x96xf32>
    %204 = vector.shape_cast %203 : vector<1x1x96xf32> to vector<1x96xf32>
    %205 = arith.truncf %200 : vector<8x32xf32> to vector<8x32xbf16>
    %cst_92 = arith.constant dense<0.000000e+00> : vector<8x96xf32>
    %206 = tpu.matmul %205, %202, %cst_92 {dimension_numbers = #tpu.dot_dimension_numbers<[1], [0], [0], [1], [0, 0, 1, 1], [], []>} : vector<8x32xbf16>, vector<32x96xbf16>, vector<8x96xf32> -> vector<8x96xf32>
    %207 = vector.broadcast %204 : vector<1x96xf32> to vector<8x96xf32>
    %208 = arith.addf %206, %207 : vector<8x96xf32>
    %209 = vector.extract_strided_slice %208 {offsets = [0, 0], sizes = [8, 8], strides = [1, 1]} : vector<8x96xf32> to vector<8x8xf32>
    %210 = vector.extract_strided_slice %208 {offsets = [0, 32], sizes = [8, 8], strides = [1, 1]} : vector<8x96xf32> to vector<8x8xf32>
    %211 = vector.extract_strided_slice %208 {offsets = [0, 64], sizes = [8, 8], strides = [1, 1]} : vector<8x96xf32> to vector<8x8xf32>
    %cst_93 = arith.constant dense<0.000000e+00> : vector<8x8xf32>
    %212 = tpu.matmul %209, %210, %cst_93 {dimension_numbers = #tpu.dot_dimension_numbers<[1], [1], [0], [0], [0, 0, 1, 0], [], []>} : vector<8x8xf32>, vector<8x8xf32>, vector<8x8xf32> -> vector<8x8xf32>
    %cst_94 = arith.constant 0.353553385 : f32
    %213 = vector.broadcast %cst_94 : f32 to vector<8x8xf32>
    %214 = arith.mulf %212, %213 : vector<8x8xf32>
    %215 = vector.broadcast %4 : vector<1x8xf32> to vector<8x8xf32>
    %216 = arith.addf %214, %215 : vector<8x8xf32>
    %cst_95 = arith.constant dense<0xFF800000> : vector<8xf32>
    %217 = vector.multi_reduction <maximumf>, %216, %cst_95 [1] : vector<8x8xf32> to vector<8xf32>
    %218 = vector.shape_cast %217 : vector<8xf32> to vector<8x1xf32>
    %219 = vector.broadcast %218 : vector<8x1xf32> to vector<8x8xf32>
    %220 = arith.subf %216, %219 : vector<8x8xf32>
    %221 = math.exp %220 : vector<8x8xf32>
    %cst_96 = arith.constant dense<0.000000e+00> : vector<8xf32>
    %222 = vector.multi_reduction <add>, %221, %cst_96 [1] : vector<8x8xf32> to vector<8xf32>
    %223 = vector.shape_cast %222 : vector<8xf32> to vector<8x1xf32>
    %224 = vector.broadcast %223 : vector<8x1xf32> to vector<8x8xf32>
    %225 = arith.divf %221, %224 : vector<8x8xf32>
    %cst_97 = arith.constant dense<0.000000e+00> : vector<8x8xf32>
    %226 = tpu.matmul %225, %211, %cst_97 {dimension_numbers = #tpu.dot_dimension_numbers<[1], [0], [0], [1], [0, 0, 1, 1], [], []>} : vector<8x8xf32>, vector<8x8xf32>, vector<8x8xf32> -> vector<8x8xf32>
    %227 = vector.extract_strided_slice %208 {offsets = [0, 8], sizes = [8, 8], strides = [1, 1]} : vector<8x96xf32> to vector<8x8xf32>
    %228 = vector.extract_strided_slice %208 {offsets = [0, 40], sizes = [8, 8], strides = [1, 1]} : vector<8x96xf32> to vector<8x8xf32>
    %229 = vector.extract_strided_slice %208 {offsets = [0, 72], sizes = [8, 8], strides = [1, 1]} : vector<8x96xf32> to vector<8x8xf32>
    %cst_98 = arith.constant dense<0.000000e+00> : vector<8x8xf32>
    %230 = tpu.matmul %227, %228, %cst_98 {dimension_numbers = #tpu.dot_dimension_numbers<[1], [1], [0], [0], [0, 0, 1, 0], [], []>} : vector<8x8xf32>, vector<8x8xf32>, vector<8x8xf32> -> vector<8x8xf32>
    %cst_99 = arith.constant 0.353553385 : f32
    %231 = vector.broadcast %cst_99 : f32 to vector<8x8xf32>
    %232 = arith.mulf %230, %231 : vector<8x8xf32>
    %233 = vector.broadcast %4 : vector<1x8xf32> to vector<8x8xf32>
    %234 = arith.addf %232, %233 : vector<8x8xf32>
    %cst_100 = arith.constant dense<0xFF800000> : vector<8xf32>
    %235 = vector.multi_reduction <maximumf>, %234, %cst_100 [1] : vector<8x8xf32> to vector<8xf32>
    %236 = vector.shape_cast %235 : vector<8xf32> to vector<8x1xf32>
    %237 = vector.broadcast %236 : vector<8x1xf32> to vector<8x8xf32>
    %238 = arith.subf %234, %237 : vector<8x8xf32>
    %239 = math.exp %238 : vector<8x8xf32>
    %cst_101 = arith.constant dense<0.000000e+00> : vector<8xf32>
    %240 = vector.multi_reduction <add>, %239, %cst_101 [1] : vector<8x8xf32> to vector<8xf32>
    %241 = vector.shape_cast %240 : vector<8xf32> to vector<8x1xf32>
    %242 = vector.broadcast %241 : vector<8x1xf32> to vector<8x8xf32>
    %243 = arith.divf %239, %242 : vector<8x8xf32>
    %cst_102 = arith.constant dense<0.000000e+00> : vector<8x8xf32>
    %244 = tpu.matmul %243, %229, %cst_102 {dimension_numbers = #tpu.dot_dimension_numbers<[1], [0], [0], [1], [0, 0, 1, 1], [], []>} : vector<8x8xf32>, vector<8x8xf32>, vector<8x8xf32> -> vector<8x8xf32>
    %245 = vector.extract_strided_slice %208 {offsets = [0, 16], sizes = [8, 8], strides = [1, 1]} : vector<8x96xf32> to vector<8x8xf32>
    %246 = vector.extract_strided_slice %208 {offsets = [0, 48], sizes = [8, 8], strides = [1, 1]} : vector<8x96xf32> to vector<8x8xf32>
    %247 = vector.extract_strided_slice %208 {offsets = [0, 80], sizes = [8, 8], strides = [1, 1]} : vector<8x96xf32> to vector<8x8xf32>
    %cst_103 = arith.constant dense<0.000000e+00> : vector<8x8xf32>
    %248 = tpu.matmul %245, %246, %cst_103 {dimension_numbers = #tpu.dot_dimension_numbers<[1], [1], [0], [0], [0, 0, 1, 0], [], []>} : vector<8x8xf32>, vector<8x8xf32>, vector<8x8xf32> -> vector<8x8xf32>
    %cst_104 = arith.constant 0.353553385 : f32
    %249 = vector.broadcast %cst_104 : f32 to vector<8x8xf32>
    %250 = arith.mulf %248, %249 : vector<8x8xf32>
    %251 = vector.broadcast %4 : vector<1x8xf32> to vector<8x8xf32>
    %252 = arith.addf %250, %251 : vector<8x8xf32>
    %cst_105 = arith.constant dense<0xFF800000> : vector<8xf32>
    %253 = vector.multi_reduction <maximumf>, %252, %cst_105 [1] : vector<8x8xf32> to vector<8xf32>
    %254 = vector.shape_cast %253 : vector<8xf32> to vector<8x1xf32>
    %255 = vector.broadcast %254 : vector<8x1xf32> to vector<8x8xf32>
    %256 = arith.subf %252, %255 : vector<8x8xf32>
    %257 = math.exp %256 : vector<8x8xf32>
    %cst_106 = arith.constant dense<0.000000e+00> : vector<8xf32>
    %258 = vector.multi_reduction <add>, %257, %cst_106 [1] : vector<8x8xf32> to vector<8xf32>
    %259 = vector.shape_cast %258 : vector<8xf32> to vector<8x1xf32>
    %260 = vector.broadcast %259 : vector<8x1xf32> to vector<8x8xf32>
    %261 = arith.divf %257, %260 : vector<8x8xf32>
    %cst_107 = arith.constant dense<0.000000e+00> : vector<8x8xf32>
    %262 = tpu.matmul %261, %247, %cst_107 {dimension_numbers = #tpu.dot_dimension_numbers<[1], [0], [0], [1], [0, 0, 1, 1], [], []>} : vector<8x8xf32>, vector<8x8xf32>, vector<8x8xf32> -> vector<8x8xf32>
    %263 = vector.extract_strided_slice %208 {offsets = [0, 24], sizes = [8, 8], strides = [1, 1]} : vector<8x96xf32> to vector<8x8xf32>
    %264 = vector.extract_strided_slice %208 {offsets = [0, 56], sizes = [8, 8], strides = [1, 1]} : vector<8x96xf32> to vector<8x8xf32>
    %265 = vector.extract_strided_slice %208 {offsets = [0, 88], sizes = [8, 8], strides = [1, 1]} : vector<8x96xf32> to vector<8x8xf32>
    %cst_108 = arith.constant dense<0.000000e+00> : vector<8x8xf32>
    %266 = tpu.matmul %263, %264, %cst_108 {dimension_numbers = #tpu.dot_dimension_numbers<[1], [1], [0], [0], [0, 0, 1, 0], [], []>} : vector<8x8xf32>, vector<8x8xf32>, vector<8x8xf32> -> vector<8x8xf32>
    %cst_109 = arith.constant 0.353553385 : f32
    %267 = vector.broadcast %cst_109 : f32 to vector<8x8xf32>
    %268 = arith.mulf %266, %267 : vector<8x8xf32>
    %269 = vector.broadcast %4 : vector<1x8xf32> to vector<8x8xf32>
    %270 = arith.addf %268, %269 : vector<8x8xf32>
    %cst_110 = arith.constant dense<0xFF800000> : vector<8xf32>
    %271 = vector.multi_reduction <maximumf>, %270, %cst_110 [1] : vector<8x8xf32> to vector<8xf32>
    %272 = vector.shape_cast %271 : vector<8xf32> to vector<8x1xf32>
    %273 = vector.broadcast %272 : vector<8x1xf32> to vector<8x8xf32>
    %274 = arith.subf %270, %273 : vector<8x8xf32>
    %275 = math.exp %274 : vector<8x8xf32>
    %cst_111 = arith.constant dense<0.000000e+00> : vector<8xf32>
    %276 = vector.multi_reduction <add>, %275, %cst_111 [1] : vector<8x8xf32> to vector<8xf32>
    %277 = vector.shape_cast %276 : vector<8xf32> to vector<8x1xf32>
    %278 = vector.broadcast %277 : vector<8x1xf32> to vector<8x8xf32>
    %279 = arith.divf %275, %278 : vector<8x8xf32>
    %cst_112 = arith.constant dense<0.000000e+00> : vector<8x8xf32>
    %280 = tpu.matmul %279, %265, %cst_112 {dimension_numbers = #tpu.dot_dimension_numbers<[1], [0], [0], [1], [0, 0, 1, 1], [], []>} : vector<8x8xf32>, vector<8x8xf32>, vector<8x8xf32> -> vector<8x8xf32>
    %281 = tpu.concatenate %226, %244, %262, %280 in 1 : vector<8x8xf32>, vector<8x8xf32>, vector<8x8xf32>, vector<8x8xf32> -> vector<8x32xf32>
    %c1_113 = arith.constant 1 : index
    %c0_114 = arith.constant 0 : index
    %c0_115 = arith.constant 0 : index
    %282 = vector.load %arg7[%c1_113, %c0_114, %c0_115] : memref<2x32x32xbf16, #tpu.memory_space<vmem>>, vector<1x32x32xbf16>
    %283 = vector.shape_cast %282 : vector<1x32x32xbf16> to vector<32x32xbf16>
    %c1_116 = arith.constant 1 : index
    %c0_117 = arith.constant 0 : index
    %c0_118 = arith.constant 0 : index
    %284 = vector.load %arg8[%c1_116, %c0_117, %c0_118] : memref<2x1x32xf32, #tpu.memory_space<vmem>>, vector<1x1x32xf32>
    %285 = vector.shape_cast %284 : vector<1x1x32xf32> to vector<1x32xf32>
    %286 = arith.truncf %281 : vector<8x32xf32> to vector<8x32xbf16>
    %cst_119 = arith.constant dense<0.000000e+00> : vector<8x32xf32>
    %287 = tpu.matmul %286, %283, %cst_119 {dimension_numbers = #tpu.dot_dimension_numbers<[1], [0], [0], [1], [0, 0, 1, 1], [], []>} : vector<8x32xbf16>, vector<32x32xbf16>, vector<8x32xf32> -> vector<8x32xf32>
    %288 = vector.broadcast %285 : vector<1x32xf32> to vector<8x32xf32>
    %289 = arith.addf %287, %288 : vector<8x32xf32>
    %290 = arith.addf %289, %200 : vector<8x32xf32>
    %c1_120 = arith.constant 1 : index
    %c0_121 = arith.constant 0 : index
    %c0_122 = arith.constant 0 : index
    %291 = vector.load %arg9[%c1_120, %c0_121, %c0_122] : memref<2x1x32xf32, #tpu.memory_space<vmem>>, vector<1x1x32xf32>
    %292 = vector.shape_cast %291 : vector<1x1x32xf32> to vector<1x32xf32>
    %c1_123 = arith.constant 1 : index
    %c0_124 = arith.constant 0 : index
    %c0_125 = arith.constant 0 : index
    %293 = vector.load %arg10[%c1_123, %c0_124, %c0_125] : memref<2x1x32xf32, #tpu.memory_space<vmem>>, vector<1x1x32xf32>
    %294 = vector.shape_cast %293 : vector<1x1x32xf32> to vector<1x32xf32>
    %cst_126 = arith.constant dense<0.000000e+00> : vector<8xf32>
    %295 = vector.multi_reduction <add>, %290, %cst_126 [1] : vector<8x32xf32> to vector<8xf32>
    %296 = vector.shape_cast %295 : vector<8xf32> to vector<8x1xf32>
    %cst_127 = arith.constant 3.200000e+01 : f32
    %297 = vector.broadcast %cst_127 : f32 to vector<8x1xf32>
    %298 = arith.divf %296, %297 : vector<8x1xf32>
    %299 = vector.broadcast %298 : vector<8x1xf32> to vector<8x32xf32>
    %300 = arith.subf %290, %299 : vector<8x32xf32>
    %301 = arith.mulf %300, %300 : vector<8x32xf32>
    %cst_128 = arith.constant dense<0.000000e+00> : vector<8xf32>
    %302 = vector.multi_reduction <add>, %301, %cst_128 [1] : vector<8x32xf32> to vector<8xf32>
    %303 = vector.shape_cast %302 : vector<8xf32> to vector<8x1xf32>
    %cst_129 = arith.constant 3.200000e+01 : f32
    %304 = vector.broadcast %cst_129 : f32 to vector<8x1xf32>
    %305 = arith.divf %303, %304 : vector<8x1xf32>
    %306 = vector.broadcast %298 : vector<8x1xf32> to vector<8x32xf32>
    %307 = arith.subf %290, %306 : vector<8x32xf32>
    %cst_130 = arith.constant 9.99999974E-6 : f32
    %308 = vector.broadcast %cst_130 : f32 to vector<8x1xf32>
    %309 = arith.addf %305, %308 : vector<8x1xf32>
    %310 = math.rsqrt %309 : vector<8x1xf32>
    %311 = vector.broadcast %310 : vector<8x1xf32> to vector<8x32xf32>
    %312 = arith.mulf %307, %311 : vector<8x32xf32>
    %313 = vector.broadcast %292 : vector<1x32xf32> to vector<8x32xf32>
    %314 = arith.mulf %312, %313 : vector<8x32xf32>
    %315 = vector.broadcast %294 : vector<1x32xf32> to vector<8x32xf32>
    %316 = arith.addf %314, %315 : vector<8x32xf32>
    %c1_131 = arith.constant 1 : index
    %c0_132 = arith.constant 0 : index
    %c0_133 = arith.constant 0 : index
    %317 = vector.load %arg11[%c1_131, %c0_132, %c0_133] : memref<2x32x64xbf16, #tpu.memory_space<vmem>>, vector<1x32x64xbf16>
    %318 = vector.shape_cast %317 : vector<1x32x64xbf16> to vector<32x64xbf16>
    %c1_134 = arith.constant 1 : index
    %c0_135 = arith.constant 0 : index
    %c0_136 = arith.constant 0 : index
    %319 = vector.load %arg12[%c1_134, %c0_135, %c0_136] : memref<2x1x64xf32, #tpu.memory_space<vmem>>, vector<1x1x64xf32>
    %320 = vector.shape_cast %319 : vector<1x1x64xf32> to vector<1x64xf32>
    %321 = arith.truncf %316 : vector<8x32xf32> to vector<8x32xbf16>
    %cst_137 = arith.constant dense<0.000000e+00> : vector<8x64xf32>
    %322 = tpu.matmul %321, %318, %cst_137 {dimension_numbers = #tpu.dot_dimension_numbers<[1], [0], [0], [1], [0, 0, 1, 1], [], []>} : vector<8x32xbf16>, vector<32x64xbf16>, vector<8x64xf32> -> vector<8x64xf32>
    %323 = vector.broadcast %320 : vector<1x64xf32> to vector<8x64xf32>
    %324 = arith.addf %322, %323 : vector<8x64xf32>
    %325 = arith.mulf %324, %324 : vector<8x64xf32>
    %326 = arith.mulf %324, %325 : vector<8x64xf32>
    %cst_138 = arith.constant 4.471500e-02 : f32
    %327 = vector.broadcast %cst_138 : f32 to vector<8x64xf32>
    %328 = arith.mulf %327, %326 : vector<8x64xf32>
    %329 = arith.addf %324, %328 : vector<8x64xf32>
    %cst_139 = arith.constant 0.797884583 : f32
    %330 = vector.broadcast %cst_139 : f32 to vector<8x64xf32>
    %331 = arith.mulf %330, %329 : vector<8x64xf32>
    %332 = math.tanh %331 : vector<8x64xf32>
    %cst_140 = arith.constant 1.000000e+00 : f32
    %333 = vector.broadcast %cst_140 : f32 to vector<8x64xf32>
    %334 = arith.addf %333, %332 : vector<8x64xf32>
    %cst_141 = arith.constant 5.000000e-01 : f32
    %335 = vector.broadcast %cst_141 : f32 to vector<8x64xf32>
    %336 = arith.mulf %335, %334 : vector<8x64xf32>
    %337 = arith.mulf %324, %336 : vector<8x64xf32>
    %c1_142 = arith.constant 1 : index
    %c0_143 = arith.constant 0 : index
    %c0_144 = arith.constant 0 : index
    %338 = vector.load %arg13[%c1_142, %c0_143, %c0_144] : memref<2x64x32xbf16, #tpu.memory_space<vmem>>, vector<1x64x32xbf16>
    %339 = vector.shape_cast %338 : vector<1x64x32xbf16> to vector<64x32xbf16>
    %c1_145 = arith.constant 1 : index
    %c0_146 = arith.constant 0 : index
    %c0_147 = arith.constant 0 : index
    %340 = vector.load %arg14[%c1_145, %c0_146, %c0_147] : memref<2x1x32xf32, #tpu.memory_space<vmem>>, vector<1x1x32xf32>
    %341 = vector.shape_cast %340 : vector<1x1x32xf32> to vector<1x32xf32>
    %342 = arith.truncf %337 : vector<8x64xf32> to vector<8x64xbf16>
    %cst_148 = arith.constant dense<0.000000e+00> : vector<8x32xf32>
    %343 = tpu.matmul %342, %339, %cst_148 {dimension_numbers = #tpu.dot_dimension_numbers<[1], [0], [0], [1], [0, 0, 1, 1], [], []>} : vector<8x64xbf16>, vector<64x32xbf16>, vector<8x32xf32> -> vector<8x32xf32>
    %344 = vector.broadcast %341 : vector<1x32xf32> to vector<8x32xf32>
    %345 = arith.addf %343, %344 : vector<8x32xf32>
    %346 = arith.addf %345, %316 : vector<8x32xf32>
    %c1_149 = arith.constant 1 : index
    %c0_150 = arith.constant 0 : index
    %c0_151 = arith.constant 0 : index
    %347 = vector.load %arg15[%c1_149, %c0_150, %c0_151] : memref<2x1x32xf32, #tpu.memory_space<vmem>>, vector<1x1x32xf32>
    %348 = vector.shape_cast %347 : vector<1x1x32xf32> to vector<1x32xf32>
    %c1_152 = arith.constant 1 : index
    %c0_153 = arith.constant 0 : index
    %c0_154 = arith.constant 0 : index
    %349 = vector.load %arg16[%c1_152, %c0_153, %c0_154] : memref<2x1x32xf32, #tpu.memory_space<vmem>>, vector<1x1x32xf32>
    %350 = vector.shape_cast %349 : vector<1x1x32xf32> to vector<1x32xf32>
    %cst_155 = arith.constant dense<0.000000e+00> : vector<8xf32>
    %351 = vector.multi_reduction <add>, %346, %cst_155 [1] : vector<8x32xf32> to vector<8xf32>
    %352 = vector.shape_cast %351 : vector<8xf32> to vector<8x1xf32>
    %cst_156 = arith.constant 3.200000e+01 : f32
    %353 = vector.broadcast %cst_156 : f32 to vector<8x1xf32>
    %354 = arith.divf %352, %353 : vector<8x1xf32>
    %355 = vector.broadcast %354 : vector<8x1xf32> to vector<8x32xf32>
    %356 = arith.subf %346, %355 : vector<8x32xf32>
    %357 = arith.mulf %356, %356 : vector<8x32xf32>
    %cst_157 = arith.constant dense<0.000000e+00> : vector<8xf32>
    %358 = vector.multi_reduction <add>, %357, %cst_157 [1] : vector<8x32xf32> to vector<8xf32>
    %359 = vector.shape_cast %358 : vector<8xf32> to vector<8x1xf32>
    %cst_158 = arith.constant 3.200000e+01 : f32
    %360 = vector.broadcast %cst_158 : f32 to vector<8x1xf32>
    %361 = arith.divf %359, %360 : vector<8x1xf32>
    %362 = vector.broadcast %354 : vector<8x1xf32> to vector<8x32xf32>
    %363 = arith.subf %346, %362 : vector<8x32xf32>
    %cst_159 = arith.constant 9.99999974E-6 : f32
    %364 = vector.broadcast %cst_159 : f32 to vector<8x1xf32>
    %365 = arith.addf %361, %364 : vector<8x1xf32>
    %366 = math.rsqrt %365 : vector<8x1xf32>
    %367 = vector.broadcast %366 : vector<8x1xf32> to vector<8x32xf32>
    %368 = arith.mulf %363, %367 : vector<8x32xf32>
    %369 = vector.broadcast %348 : vector<1x32xf32> to vector<8x32xf32>
    %370 = arith.mulf %368, %369 : vector<8x32xf32>
    %371 = vector.broadcast %350 : vector<1x32xf32> to vector<8x32xf32>
    %372 = arith.addf %370, %371 : vector<8x32xf32>
    %373 = vector.extract_strided_slice %372 {offsets = [0, 0], sizes = [1, 32], strides = [1, 1]} : vector<8x32xf32> to vector<1x32xf32>
    %c0_160 = arith.constant 0 : index
    %c0_161 = arith.constant 0 : index
    %374 = vector.load %arg17[%c0_160, %c0_161] : memref<32x32xbf16, #tpu.memory_space<vmem>>, vector<32x32xbf16>
    %c0_162 = arith.constant 0 : index
    %c0_163 = arith.constant 0 : index
    %375 = vector.load %arg18[%c0_162, %c0_163] : memref<1x32xf32, #tpu.memory_space<vmem>>, vector<1x32xf32>
    %376 = arith.truncf %373 : vector<1x32xf32> to vector<1x32xbf16>
    %cst_164 = arith.constant dense<0.000000e+00> : vector<1x32xf32>
    %377 = tpu.matmul %376, %374, %cst_164 {dimension_numbers = #tpu.dot_dimension_numbers<[1], [0], [0], [1], [0, 0, 1, 1], [], []>} : vector<1x32xbf16>, vector<32x32xbf16>, vector<1x32xf32> -> vector<1x32xf32>
    %378 = arith.addf %377, %375 : vector<1x32xf32>
    %379 = math.tanh %378 : vector<1x32xf32>
    %c0_165 = arith.constant 0 : index
    %c0_166 = arith.constant 0 : index
    %380 = vector.load %arg19[%c0_165, %c0_166] : memref<32x128xbf16, #tpu.memory_space<vmem>>, vector<32x128xbf16>
    %c0_167 = arith.constant 0 : index
    %c0_168 = arith.constant 0 : index
    %381 = vector.load %arg20[%c0_167, %c0_168] : memref<1x128xf32, #tpu.memory_space<vmem>>, vector<1x128xf32>
    %382 = arith.truncf %379 : vector<1x32xf32> to vector<1x32xbf16>
    %cst_169 = arith.constant dense<0.000000e+00> : vector<1x128xf32>
    %383 = tpu.matmul %382, %380, %cst_169 {dimension_numbers = #tpu.dot_dimension_numbers<[1], [0], [0], [1], [0, 0, 1, 1], [], []>} : vector<1x32xbf16>, vector<32x128xbf16>, vector<1x128xf32> -> vector<1x128xf32>
    %384 = arith.addf %383, %381 : vector<1x128xf32>
    %385 = vector.shape_cast %384 : vector<1x128xf32> to vector<1x1x128xf32>
    %c0_170 = arith.constant 0 : index
    %c0_171 = arith.constant 0 : index
    %c0_172 = arith.constant 0 : index
    %386 = vector.load %arg21[%c0_170, %c0_171, %c0_172] : memref<1x1x128xf32, #tpu.memory_space<vmem>>, vector<1x1x128xf32>
    tpu.vector_store %arg21[%c0_170, %c0_171, %c0_172], %385 {strides = array<i32>} : memref<1x1x128xf32, #tpu.memory_space<vmem>>, vector<1x1x128xf32>,
    return
  }
  func.func @transform_0(%arg0: i32) -> (i32, i32, i32) {
    %c0_i32 = arith.constant 0 : i32
    %c0_i32_0 = arith.constant 0 : i32
    %c0_i32_1 = arith.constant 0 : i32
    return %arg0, %c0_i32, %c0_i32_0 : i32, i32, i32
  }
  func.func @transform_1(%arg0: i32) -> (i32, i32, i32) {
    %c0_i32 = arith.constant 0 : i32
    %c0_i32_0 = arith.constant 0 : i32
    %c0_i32_1 = arith.constant 0 : i32
    return %arg0, %c0_i32, %c0_i32_0 : i32, i32, i32
  }
  func.func @transform_2(%arg0: i32) -> (i32, i32) {
    %c0_i32 = arith.constant 0 : i32
    %c0_i32_0 = arith.constant 0 : i32
    %c0_i32_1 = arith.constant 0 : i32
    return %c0_i32, %c0_i32_0 : i32, i32
  }
  func.func @transform_3(%arg0: i32) -> (i32, i32) {
    %c0_i32 = arith.constant 0 : i32
    %c0_i32_0 = arith.constant 0 : i32
    %c0_i32_1 = arith.constant 0 : i32
    return %c0_i32, %c0_i32_0 : i32, i32
  }
  func.func @transform_4(%arg0: i32) -> (i32, i32, i32) {
    %c0_i32 = arith.constant 0 : i32
    %c0_i32_0 = arith.constant 0 : i32
    %c0_i32_1 = arith.constant 0 : i32
    %c0_i32_2 = arith.constant 0 : i32
    return %c0_i32, %c0_i32_0, %c0_i32_1 : i32, i32, i32
  }
  func.func @transform_5(%arg0: i32) -> (i32, i32, i32) {
    %c0_i32 = arith.constant 0 : i32
    %c0_i32_0 = arith.constant 0 : i32
    %c0_i32_1 = arith.constant 0 : i32
    %c0_i32_2 = arith.constant 0 : i32
    return %c0_i32, %c0_i32_0, %c0_i32_1 : i32, i32, i32
  }
  func.func @transform_6(%arg0: i32) -> (i32, i32, i32) {
    %c0_i32 = arith.constant 0 : i32
    %c0_i32_0 = arith.constant 0 : i32
    %c0_i32_1 = arith.constant 0 : i32
    %c0_i32_2 = arith.constant 0 : i32
    return %c0_i32, %c0_i32_0, %c0_i32_1 : i32, i32, i32
  }
  func.func @transform_7(%arg0: i32) -> (i32, i32, i32) {
    %c0_i32 = arith.constant 0 : i32
    %c0_i32_0 = arith.constant 0 : i32
    %c0_i32_1 = arith.constant 0 : i32
    %c0_i32_2 = arith.constant 0 : i32
    return %c0_i32, %c0_i32_0, %c0_i32_1 : i32, i32, i32
  }
  func.func @transform_8(%arg0: i32) -> (i32, i32, i32) {
    %c0_i32 = arith.constant 0 : i32
    %c0_i32_0 = arith.constant 0 : i32
    %c0_i32_1 = arith.constant 0 : i32
    %c0_i32_2 = arith.constant 0 : i32
    return %c0_i32, %c0_i32_0, %c0_i32_1 : i32, i32, i32
  }
  func.func @transform_9(%arg0: i32) -> (i32, i32, i32) {
    %c0_i32 = arith.constant 0 : i32
    %c0_i32_0 = arith.constant 0 : i32
    %c0_i32_1 = arith.constant 0 : i32
    %c0_i32_2 = arith.constant 0 : i32
    return %c0_i32, %c0_i32_0, %c0_i32_1 : i32, i32, i32
  }
  func.func @transform_10(%arg0: i32) -> (i32, i32, i32) {
    %c0_i32 = arith.constant 0 : i32
    %c0_i32_0 = arith.constant 0 : i32
    %c0_i32_1 = arith.constant 0 : i32
    %c0_i32_2 = arith.constant 0 : i32
    return %c0_i32, %c0_i32_0, %c0_i32_1 : i32, i32, i32
  }
  func.func @transform_11(%arg0: i32) -> (i32, i32, i32) {
    %c0_i32 = arith.constant 0 : i32
    %c0_i32_0 = arith.constant 0 : i32
    %c0_i32_1 = arith.constant 0 : i32
    %c0_i32_2 = arith.constant 0 : i32
    return %c0_i32, %c0_i32_0, %c0_i32_1 : i32, i32, i32
  }
  func.func @transform_12(%arg0: i32) -> (i32, i32, i32) {
    %c0_i32 = arith.constant 0 : i32
    %c0_i32_0 = arith.constant 0 : i32
    %c0_i32_1 = arith.constant 0 : i32
    %c0_i32_2 = arith.constant 0 : i32
    return %c0_i32, %c0_i32_0, %c0_i32_1 : i32, i32, i32
  }
  func.func @transform_13(%arg0: i32) -> (i32, i32, i32) {
    %c0_i32 = arith.constant 0 : i32
    %c0_i32_0 = arith.constant 0 : i32
    %c0_i32_1 = arith.constant 0 : i32
    %c0_i32_2 = arith.constant 0 : i32
    return %c0_i32, %c0_i32_0, %c0_i32_1 : i32, i32, i32
  }
  func.func @transform_14(%arg0: i32) -> (i32, i32, i32) {
    %c0_i32 = arith.constant 0 : i32
    %c0_i32_0 = arith.constant 0 : i32
    %c0_i32_1 = arith.constant 0 : i32
    %c0_i32_2 = arith.constant 0 : i32
    return %c0_i32, %c0_i32_0, %c0_i32_1 : i32, i32, i32
  }
  func.func @transform_15(%arg0: i32) -> (i32, i32, i32) {
    %c0_i32 = arith.constant 0 : i32
    %c0_i32_0 = arith.constant 0 : i32
    %c0_i32_1 = arith.constant 0 : i32
    %c0_i32_2 = arith.constant 0 : i32
    return %c0_i32, %c0_i32_0, %c0_i32_1 : i32, i32, i32
  }
  func.func @transform_16(%arg0: i32) -> (i32, i32) {
    %c0_i32 = arith.constant 0 : i32
    %c0_i32_0 = arith.constant 0 : i32
    %c0_i32_1 = arith.constant 0 : i32
    return %c0_i32, %c0_i32_0 : i32, i32
  }
  func.func @transform_17(%arg0: i32) -> (i32, i32) {
    %c0_i32 = arith.constant 0 : i32
    %c0_i32_0 = arith.constant 0 : i32
    %c0_i32_1 = arith.constant 0 : i32
    return %c0_i32, %c0_i32_0 : i32, i32
  }
  func.func @transform_18(%arg0: i32) -> (i32, i32) {
    %c0_i32 = arith.constant 0 : i32
    %c0_i32_0 = arith.constant 0 : i32
    %c0_i32_1 = arith.constant 0 : i32
    return %c0_i32, %c0_i32_0 : i32, i32
  }
  func.func @transform_19(%arg0: i32) -> (i32, i32) {
    %c0_i32 = arith.constant 0 : i32
    %c0_i32_0 = arith.constant 0 : i32
    %c0_i32_1 = arith.constant 0 : i32
    return %c0_i32, %c0_i32_0 : i32, i32
  }
  func.func @transform_20(%arg0: i32) -> (i32, i32, i32) {
    %c0_i32 = arith.constant 0 : i32
    %c0_i32_0 = arith.constant 0 : i32
    %c0_i32_1 = arith.constant 0 : i32
    return %arg0, %c0_i32, %c0_i32_0 : i32, i32, i32
  }
}

</mosaic_0001>

<llo_original>
// kernel: _lambda_.1
$region0: #{_lambda_.1}
  #allocation0 [shape = 'u32[]', space=smem, size = 0x4, offset = 0x4, fixed_abs, tag = 'smem constant byte address 0x4 - core index']
  #allocation1 [shape = 'u32[72,128]{1,0:T(1,128)}', space=vmem, size = 0x9000, scoped, tag = 'internal scratch']
  %s0 = inlined_call_operand.vmem [shape: bf16[2,8,32], index: 0, kind: input, shape index: {}]
  %s1 = inlined_call_operand.vmem [shape: f32[2,1,8], index: 1, kind: input, shape index: {}]
  %s2 = inlined_call_operand.vmem [shape: f32[1,32], index: 2, kind: input, shape index: {}]
  %s3 = inlined_call_operand.vmem [shape: f32[1,32], index: 3, kind: input, shape index: {}, may-alias: {3,17}]
  %s4 = inlined_call_operand.vmem [shape: bf16[2,32,96], index: 4, kind: input, shape index: {}]
  %s5 = inlined_call_operand.vmem [shape: f32[2,1,96], index: 5, kind: input, shape index: {}]
  %s6 = inlined_call_operand.vmem [shape: bf16[2,32,32], index: 6, kind: input, shape index: {}]
  %s7 = inlined_call_operand.vmem [shape: f32[2,1,32], index: 7, kind: input, shape index: {}, may-alias: {7,9,13,15}]
  %s8 = inlined_call_operand.vmem [shape: f32[2,1,32], index: 8, kind: input, shape index: {}, may-alias: {8,14}]
  %s9 = inlined_call_operand.vmem [shape: f32[2,1,32], index: 9, kind: input, shape index: {}, may-alias: {7,9,13,15}]
  %s10 = inlined_call_operand.vmem [shape: bf16[2,32,64], index: 10, kind: input, shape index: {}]
  %s11 = inlined_call_operand.vmem [shape: f32[2,1,64], index: 11, kind: input, shape index: {}]
  %s12 = inlined_call_operand.vmem [shape: bf16[2,64,32], index: 12, kind: input, shape index: {}]
  %s13 = inlined_call_operand.vmem [shape: f32[2,1,32], index: 13, kind: input, shape index: {}, may-alias: {7,9,13,15}]
  %s14 = inlined_call_operand.vmem [shape: f32[2,1,32], index: 14, kind: input, shape index: {}, may-alias: {8,14}]
  %s15 = inlined_call_operand.vmem [shape: f32[2,1,32], index: 15, kind: input, shape index: {}, may-alias: {7,9,13,15}]
  %s16 = inlined_call_operand.vmem [shape: bf16[32,32], index: 16, kind: input, shape index: {}]
  %s17 = inlined_call_operand.vmem [shape: f32[1,32], index: 17, kind: input, shape index: {}, may-alias: {3,17}]
  %s18 = inlined_call_operand.vmem [shape: bf16[32,128], index: 18, kind: input, shape index: {}]
  %s19 = inlined_call_operand.vmem [shape: f32[1,128], index: 19, kind: input, shape index: {}]
  %s20 = inlined_call_operand.hbm [shape: f32[2,1,128], index: 20, kind: output, shape index: {}]
  %s21 = sld [smem:[#allocation0]]
  $region113: #{_lambda_.1} parent=0
    _
  %s23 = ssub.s32 1, %s21
  %s24 = scalar_select 0, %s23, %s21
  $region1: #{_lambda_.1} parent=0
    #allocation2 [shape = 'u8[1024]{0}', space=vmem, size = 0x400, scoped, tag = 'output window, operand 0']
    #allocation3 [shape = 's32[2]{0}', space=sflag, size = 0x8, scoped, tag = 'scoped memory for _lambda_.1']
    %25 = vsyncpa [#allocation3], 0
    %s26 = scalar_lea.sflag [#allocation3], 1
    %27 = vsyncpa %s26, 0
    loop: start=0, step=1, limit=4
    $region2: #{_lambda_.1} parent=1 // loop_pre_header
      _
    $region3: #{_lambda_.1} parent=1 // loop_header
      %s29 = sphi 0, %s33
      %p30 = scmp.ge.s32.totalorder %s29, 4
      %s39 = sphi 0, %s41
      %s42 = sphi 0, %s39
      %s43 = sphi 0, %s42
      %s59 = sphi 0, %s43
      %s65 = sphi 0, %s67
      %s68 = sphi 0, %s65
      %s69 = sphi 0, %s68
      %s85 = sphi 0, %s69
      %s89 = sphi 0, %s89
      %s91 = sphi 0, %s89
      %s92 = sphi 0, %s91
      %s106 = sphi 0, %s92
      %s110 = sphi 0, %s110
      %s112 = sphi 0, %s110
      %s113 = sphi 0, %s112
      %s127 = sphi 0, %s113
      %s131 = sphi 0, %s131
      %s133 = sphi 0, %s131
      %s134 = sphi 0, %s133
      %s148 = sphi 0, %s134
      %s152 = sphi 0, %s152
      %s154 = sphi 0, %s152
      %s155 = sphi 0, %s154
      %s169 = sphi 0, %s155
      %s173 = sphi 0, %s173
      %s175 = sphi 0, %s173
      %s176 = sphi 0, %s175
      %s190 = sphi 0, %s176
      %s194 = sphi 0, %s194
      %s196 = sphi 0, %s194
      %s197 = sphi 0, %s196
      %s211 = sphi 0, %s197
      %s215 = sphi 0, %s215
      %s217 = sphi 0, %s215
      %s218 = sphi 0, %s217
      %s232 = sphi 0, %s218
      %s236 = sphi 0, %s236
      %s238 = sphi 0, %s236
      %s239 = sphi 0, %s238
      %s253 = sphi 0, %s239
      %s257 = sphi 0, %s257
      %s259 = sphi 0, %s257
      %s260 = sphi 0, %s259
      %s274 = sphi 0, %s260
      %s278 = sphi 0, %s278
      %s280 = sphi 0, %s278
      %s281 = sphi 0, %s280
      %s295 = sphi 0, %s281
      %s299 = sphi 0, %s299
      %s301 = sphi 0, %s299
      %s302 = sphi 0, %s301
      %s316 = sphi 0, %s302
      %s320 = sphi 0, %s320
      %s322 = sphi 0, %s320
      %s323 = sphi 0, %s322
      %s337 = sphi 0, %s323
      %s341 = sphi 0, %s341
      %s343 = sphi 0, %s341
      %s344 = sphi 0, %s343
      %s358 = sphi 0, %s344
      %s362 = sphi 0, %s362
      %s364 = sphi 0, %s362
      %s365 = sphi 0, %s364
      %s379 = sphi 0, %s365
      %s383 = sphi 0, %s383
      %s385 = sphi 0, %s383
      %s386 = sphi 0, %s385
      %s400 = sphi 0, %s386
      %s404 = sphi 0, %s404
      %s406 = sphi 0, %s404
      %s407 = sphi 0, %s406
      %s421 = sphi 0, %s407
      %s425 = sphi 0, %s425
      %s427 = sphi 0, %s425
      %s428 = sphi 0, %s427
      %s442 = sphi 0, %s428
      %s446 = sphi 0, %s446
      %s448 = sphi 0, %s446
      %s449 = sphi 0, %s448
      %s463 = sphi 0, %s449
      %s469 = sphi 0, %s471
      %s472 = sphi 0, %s469
      %s473 = sphi 0, %s472
      %s489 = sphi 0, %s473
    $region4: #{_lambda_.1} parent=1 // loop_header_branch
      %32 = sbr.rel (%p30) target = $region8
    $region5: #{_lambda_.1} parent=1 // loop_body
      %s34 = ssub.s32 %s29, 1
      %s35 = ssub.s32 %s29, 2
      %s36 = sadd.s32 %s29, 1
      %s37 = ssub.s32 %s29, %s36
      %p38 = scmp.eq.s32.totalorder %s37, 0
      %s40 = sadd.s32 %s39, 1
      %s41 = scalar_select %p38, %s39, %s40
      %p44 = pneg %p38
      %p45 = scmp.eq.s32.totalorder %s29, 1
      %p46 = por %p44, %p45
      %p47 = scmp.ne.s32.totalorder %s39, %s42
      %p48 = scmp.eq.s32.totalorder %s29, 0
      %p49 = por %p47, %p48
      %p50 = scmp.ne.s32.totalorder %s39, %s42
      %p51 = scmp.eq.s32.totalorder %s34, 1
      %p52 = por %p50, %p51
      %p53 = scmp.ne.s32.totalorder %s42, %s43
      %p54 = scmp.eq.s32.totalorder %s34, 0
      %p55 = por %p53, %p54
      %p56 = scmp.ne.s32.totalorder %s42, %s43
      %p57 = scmp.eq.s32.totalorder %s35, 1
      %p58 = por %p56, %p57
      %p60 = scmp.ne.s32.totalorder %s43, %s59
      %p61 = scmp.eq.s32.totalorder %s35, 0
      %p62 = por %p60, %p61
      %s63 = ssub.s32 %s29, %s36
      %p64 = scmp.eq.s32.totalorder %s63, 0
      %s66 = sadd.s32 %s65, 1
      %s67 = scalar_select %p64, %s65, %s66
      %p70 = pneg %p64
      %p71 = scmp.eq.s32.totalorder %s29, 1
      %p72 = por %p70, %p71
      %p73 = scmp.ne.s32.totalorder %s65, %s68
      %p74 = scmp.eq.s32.totalorder %s29, 0
      %p75 = por %p73, %p74
      %p76 = scmp.ne.s32.totalorder %s65, %s68
      %p77 = scmp.eq.s32.totalorder %s34, 1
      %p78 = por %p76, %p77
      %p79 = scmp.ne.s32.totalorder %s68, %s69
      %p80 = scmp.eq.s32.totalorder %s34, 0
      %p81 = por %p79, %p80
      %p82 = scmp.ne.s32.totalorder %s68, %s69
      %p83 = scmp.eq.s32.totalorder %s35, 1
      %p84 = por %p82, %p83
      %p86 = scmp.ne.s32.totalorder %s69, %s85
      %p87 = scmp.eq.s32.totalorder %s35, 0
      %p88 = por %p86, %p87
      %s90 = sadd.s32 %s89, 1
      %p93 = scmp.eq.s32.totalorder %s29, 1
      %p94 = scmp.ne.s32.totalorder %s89, %s91
      %p95 = scmp.eq.s32.totalorder %s29, 0
      %p96 = por %p94, %p95
      %p97 = scmp.ne.s32.totalorder %s89, %s91
      %p98 = scmp.eq.s32.totalorder %s34, 1
      %p99 = por %p97, %p98
      %p100 = scmp.ne.s32.totalorder %s91, %s92
      %p101 = scmp.eq.s32.totalorder %s34, 0
      %p102 = por %p100, %p101
      %p103 = scmp.ne.s32.totalorder %s91, %s92
      %p104 = scmp.eq.s32.totalorder %s35, 1
      %p105 = por %p103, %p104
      %p107 = scmp.ne.s32.totalorder %s92, %s106
      %p108 = scmp.eq.s32.totalorder %s35, 0
      %p109 = por %p107, %p108
      %s111 = sadd.s32 %s110, 1
      %p114 = scmp.eq.s32.totalorder %s29, 1
      %p115 = scmp.ne.s32.totalorder %s110, %s112
      %p116 = scmp.eq.s32.totalorder %s29, 0
      %p117 = por %p115, %p116
      %p118 = scmp.ne.s32.totalorder %s110, %s112
      %p119 = scmp.eq.s32.totalorder %s34, 1
      %p120 = por %p118, %p119
      %p121 = scmp.ne.s32.totalorder %s112, %s113
      %p122 = scmp.eq.s32.totalorder %s34, 0
      %p123 = por %p121, %p122
      %p124 = scmp.ne.s32.totalorder %s112, %s113
      %p125 = scmp.eq.s32.totalorder %s35, 1
      %p126 = por %p124, %p125
      %p128 = scmp.ne.s32.totalorder %s113, %s127
      %p129 = scmp.eq.s32.totalorder %s35, 0
      %p130 = por %p128, %p129
      %s132 = sadd.s32 %s131, 1
      %p135 = scmp.eq.s32.totalorder %s29, 1
      %p136 = scmp.ne.s32.totalorder %s131, %s133
      %p137 = scmp.eq.s32.totalorder %s29, 0
      %p138 = por %p136, %p137
      %p139 = scmp.ne.s32.totalorder %s131, %s133
      %p140 = scmp.eq.s32.totalorder %s34, 1
      %p141 = por %p139, %p140
      %p142 = scmp.ne.s32.totalorder %s133, %s134
      %p143 = scmp.eq.s32.totalorder %s34, 0
      %p144 = por %p142, %p143
      %p145 = scmp.ne.s32.totalorder %s133, %s134
      %p146 = scmp.eq.s32.totalorder %s35, 1
      %p147 = por %p145, %p146
      %p149 = scmp.ne.s32.totalorder %s134, %s148
      %p150 = scmp.eq.s32.totalorder %s35, 0
      %p151 = por %p149, %p150
      %s153 = sadd.s32 %s152, 1
      %p156 = scmp.eq.s32.totalorder %s29, 1
      %p157 = scmp.ne.s32.totalorder %s152, %s154
      %p158 = scmp.eq.s32.totalorder %s29, 0
      %p159 = por %p157, %p158
      %p160 = scmp.ne.s32.totalorder %s152, %s154
      %p161 = scmp.eq.s32.totalorder %s34, 1
      %p162 = por %p160, %p161
      %p163 = scmp.ne.s32.totalorder %s154, %s155
      %p164 = scmp.eq.s32.totalorder %s34, 0
      %p165 = por %p163, %p164
      %p166 = scmp.ne.s32.totalorder %s154, %s155
      %p167 = scmp.eq.s32.totalorder %s35, 1
      %p168 = por %p166, %p167
      %p170 = scmp.ne.s32.totalorder %s155, %s169
      %p171 = scmp.eq.s32.totalorder %s35, 0
      %p172 = por %p170, %p171
      %s174 = sadd.s32 %s173, 1
      %p177 = scmp.eq.s32.totalorder %s29, 1
      %p178 = scmp.ne.s32.totalorder %s173, %s175
      %p179 = scmp.eq.s32.totalorder %s29, 0
      %p180 = por %p178, %p179
      %p181 = scmp.ne.s32.totalorder %s173, %s175
      %p182 = scmp.eq.s32.totalorder %s34, 1
      %p183 = por %p181, %p182
      %p184 = scmp.ne.s32.totalorder %s175, %s176
      %p185 = scmp.eq.s32.totalorder %s34, 0
      %p186 = por %p184, %p185
      %p187 = scmp.ne.s32.totalorder %s175, %s176
      %p188 = scmp.eq.s32.totalorder %s35, 1
      %p189 = por %p187, %p188
      %p191 = scmp.ne.s32.totalorder %s176, %s190
      %p192 = scmp.eq.s32.totalorder %s35, 0
      %p193 = por %p191, %p192
      %s195 = sadd.s32 %s194, 1
      %p198 = scmp.eq.s32.totalorder %s29, 1
      %p199 = scmp.ne.s32.totalorder %s194, %s196
      %p200 = scmp.eq.s32.totalorder %s29, 0
      %p201 = por %p199, %p200
      %p202 = scmp.ne.s32.totalorder %s194, %s196
      %p203 = scmp.eq.s32.totalorder %s34, 1
      %p204 = por %p202, %p203
      %p205 = scmp.ne.s32.totalorder %s196, %s197
      %p206 = scmp.eq.s32.totalorder %s34, 0
      %p207 = por %p205, %p206
      %p208 = scmp.ne.s32.totalorder %s196, %s197
      %p209 = scmp.eq.s32.totalorder %s35, 1
      %p210 = por %p208, %p209
      %p212 = scmp.ne.s32.totalorder %s197, %s211
      %p213 = scmp.eq.s32.totalorder %s35, 0
      %p214 = por %p212, %p213
      %s216 = sadd.s32 %s215, 1
      %p219 = scmp.eq.s32.totalorder %s29, 1
      %p220 = scmp.ne.s32.totalorder %s215, %s217
      %p221 = scmp.eq.s32.totalorder %s29, 0
      %p222 = por %p220, %p221
      %p223 = scmp.ne.s32.totalorder %s215, %s217
      %p224 = scmp.eq.s32.totalorder %s34, 1
      %p225 = por %p223, %p224
      %p226 = scmp.ne.s32.totalorder %s217, %s218
      %p227 = scmp.eq.s32.totalorder %s34, 0
      %p228 = por %p226, %p227
      %p229 = scmp.ne.s32.totalorder %s217, %s218
      %p230 = scmp.eq.s32.totalorder %s35, 1
      %p231 = por %p229, %p230
      %p233 = scmp.ne.s32.totalorder %s218, %s232
      %p234 = scmp.eq.s32.totalorder %s35, 0
      %p235 = por %p233, %p234
      %s237 = sadd.s32 %s236, 1
      %p240 = scmp.eq.s32.totalorder %s29, 1
      %p241 = scmp.ne.s32.totalorder %s236, %s238
      %p242 = scmp.eq.s32.totalorder %s29, 0
      %p243 = por %p241, %p242
      %p244 = scmp.ne.s32.totalorder %s236, %s238
      %p245 = scmp.eq.s32.totalorder %s34, 1
      %p246 = por %p244, %p245
      %p247 = scmp.ne.s32.totalorder %s238, %s239
      %p248 = scmp.eq.s32.totalorder %s34, 0
      %p249 = por %p247, %p248
      %p250 = scmp.ne.s32.totalorder %s238, %s239
      %p251 = scmp.eq.s32.totalorder %s35, 1
      %p252 = por %p250, %p251
      %p254 = scmp.ne.s32.totalorder %s239, %s253
      %p255 = scmp.eq.s32.totalorder %s35, 0
      %p256 = por %p254, %p255
      %s258 = sadd.s32 %s257, 1
      %p261 = scmp.eq.s32.totalorder %s29, 1
      %p262 = scmp.ne.s32.totalorder %s257, %s259
      %p263 = scmp.eq.s32.totalorder %s29, 0
      %p264 = por %p262, %p263
      %p265 = scmp.ne.s32.totalorder %s257, %s259
      %p266 = scmp.eq.s32.totalorder %s34, 1
      %p267 = por %p265, %p266
      %p268 = scmp.ne.s32.totalorder %s259, %s260
      %p269 = scmp.eq.s32.totalorder %s34, 0
      %p270 = por %p268, %p269
      %p271 = scmp.ne.s32.totalorder %s259, %s260
      %p272 = scmp.eq.s32.totalorder %s35, 1
      %p273 = por %p271, %p272
      %p275 = scmp.ne.s32.totalorder %s260, %s274
      %p276 = scmp.eq.s32.totalorder %s35, 0
      %p277 = por %p275, %p276
      %s279 = sadd.s32 %s278, 1
      %p282 = scmp.eq.s32.totalorder %s29, 1
      %p283 = scmp.ne.s32.totalorder %s278, %s280
      %p284 = scmp.eq.s32.totalorder %s29, 0
      %p285 = por %p283, %p284
      %p286 = scmp.ne.s32.totalorder %s278, %s280
      %p287 = scmp.eq.s32.totalorder %s34, 1
      %p288 = por %p286, %p287
      %p289 = scmp.ne.s32.totalorder %s280, %s281
      %p290 = scmp.eq.s32.totalorder %s34, 0
      %p291 = por %p289, %p290
      %p292 = scmp.ne.s32.totalorder %s280, %s281
      %p293 = scmp.eq.s32.totalorder %s35, 1
      %p294 = por %p292, %p293
      %p296 = scmp.ne.s32.totalorder %s281, %s295
      %p297 = scmp.eq.s32.totalorder %s35, 0
      %p298 = por %p296, %p297
      %s300 = sadd.s32 %s299, 1
      %p303 = scmp.eq.s32.totalorder %s29, 1
      %p304 = scmp.ne.s32.totalorder %s299, %s301
      %p305 = scmp.eq.s32.totalorder %s29, 0
      %p306 = por %p304, %p305
      %p307 = scmp.ne.s32.totalorder %s299, %s301
      %p308 = scmp.eq.s32.totalorder %s34, 1
      %p309 = por %p307, %p308
      %p310 = scmp.ne.s32.totalorder %s301, %s302
      %p311 = scmp.eq.s32.totalorder %s34, 0
      %p312 = por %p310, %p311
      %p313 = scmp.ne.s32.totalorder %s301, %s302
      %p314 = scmp.eq.s32.totalorder %s35, 1
      %p315 = por %p313, %p314
      %p317 = scmp.ne.s32.totalorder %s302, %s316
      %p318 = scmp.eq.s32.totalorder %s35, 0
      %p319 = por %p317, %p318
      %s321 = sadd.s32 %s320, 1
      %p324 = scmp.eq.s32.totalorder %s29, 1
      %p325 = scmp.ne.s32.totalorder %s320, %s322
      %p326 = scmp.eq.s32.totalorder %s29, 0
      %p327 = por %p325, %p326
      %p328 = scmp.ne.s32.totalorder %s320, %s322
      %p329 = scmp.eq.s32.totalorder %s34, 1
      %p330 = por %p328, %p329
      %p331 = scmp.ne.s32.totalorder %s322, %s323
      %p332 = scmp.eq.s32.totalorder %s34, 0
      %p333 = por %p331, %p332
      %p334 = scmp.ne.s32.totalorder %s322, %s323
      %p335 = scmp.eq.s32.totalorder %s35, 1
      %p336 = por %p334, %p335
      %p338 = scmp.ne.s32.totalorder %s323, %s337
      %p339 = scmp.eq.s32.totalorder %s35, 0
      %p340 = por %p338, %p339
      %s342 = sadd.s32 %s341, 1
      %p345 = scmp.eq.s32.totalorder %s29, 1
      %p346 = scmp.ne.s32.totalorder %s341, %s343
      %p347 = scmp.eq.s32.totalorder %s29, 0
      %p348 = por %p346, %p347
      %p349 = scmp.ne.s32.totalorder %s341, %s343
      %p350 = scmp.eq.s32.totalorder %s34, 1
      %p351 = por %p349, %p350
      %p352 = scmp.ne.s32.totalorder %s343, %s344
      %p353 = scmp.eq.s32.totalorder %s34, 0
      %p354 = por %p352, %p353
      %p355 = scmp.ne.s32.totalorder %s343, %s344
      %p356 = scmp.eq.s32.totalorder %s35, 1
      %p357 = por %p355, %p356
      %p359 = scmp.ne.s32.totalorder %s344, %s358
      %p360 = scmp.eq.s32.totalorder %s35, 0
      %p361 = por %p359, %p360
      %s363 = sadd.s32 %s362, 1
      %p366 = scmp.eq.s32.totalorder %s29, 1
      %p367 = scmp.ne.s32.totalorder %s362, %s364
      %p368 = scmp.eq.s32.totalorder %s29, 0
      %p369 = por %p367, %p368
      %p370 = scmp.ne.s32.totalorder %s362, %s364
      %p371 = scmp.eq.s32.totalorder %s34, 1
      %p372 = por %p370, %p371
      %p373 = scmp.ne.s32.totalorder %s364, %s365
      %p374 = scmp.eq.s32.totalorder %s34, 0
      %p375 = por %p373, %p374
      %p376 = scmp.ne.s32.totalorder %s364, %s365
      %p377 = scmp.eq.s32.totalorder %s35, 1
      %p378 = por %p376, %p377
      %p380 = scmp.ne.s32.totalorder %s365, %s379
      %p381 = scmp.eq.s32.totalorder %s35, 0
      %p382 = por %p380, %p381
      %s384 = sadd.s32 %s383, 1
      %p387 = scmp.eq.s32.totalorder %s29, 1
      %p388 = scmp.ne.s32.totalorder %s383, %s385
      %p389 = scmp.eq.s32.totalorder %s29, 0
      %p390 = por %p388, %p389
      %p391 = scmp.ne.s32.totalorder %s383, %s385
      %p392 = scmp.eq.s32.totalorder %s34, 1
      %p393 = por %p391, %p392
      %p394 = scmp.ne.s32.totalorder %s385, %s386
      %p395 = scmp.eq.s32.totalorder %s34, 0
      %p396 = por %p394, %p395
      %p397 = scmp.ne.s32.totalorder %s385, %s386
      %p398 = scmp.eq.s32.totalorder %s35, 1
      %p399 = por %p397, %p398
      %p401 = scmp.ne.s32.totalorder %s386, %s400
      %p402 = scmp.eq.s32.totalorder %s35, 0
      %p403 = por %p401, %p402
      %s405 = sadd.s32 %s404, 1
      %p408 = scmp.eq.s32.totalorder %s29, 1
      %p409 = scmp.ne.s32.totalorder %s404, %s406
      %p410 = scmp.eq.s32.totalorder %s29, 0
      %p411 = por %p409, %p410
      %p412 = scmp.ne.s32.totalorder %s404, %s406
      %p413 = scmp.eq.s32.totalorder %s34, 1
      %p414 = por %p412, %p413
      %p415 = scmp.ne.s32.totalorder %s406, %s407
      %p416 = scmp.eq.s32.totalorder %s34, 0
      %p417 = por %p415, %p416
      %p418 = scmp.ne.s32.totalorder %s406, %s407
      %p419 = scmp.eq.s32.totalorder %s35, 1
      %p420 = por %p418, %p419
      %p422 = scmp.ne.s32.totalorder %s407, %s421
      %p423 = scmp.eq.s32.totalorder %s35, 0
      %p424 = por %p422, %p423
      %s426 = sadd.s32 %s425, 1
      %p429 = scmp.eq.s32.totalorder %s29, 1
      %p430 = scmp.ne.s32.totalorder %s425, %s427
      %p431 = scmp.eq.s32.totalorder %s29, 0
      %p432 = por %p430, %p431
      %p433 = scmp.ne.s32.totalorder %s425, %s427
      %p434 = scmp.eq.s32.totalorder %s34, 1
      %p435 = por %p433, %p434
      %p436 = scmp.ne.s32.totalorder %s427, %s428
      %p437 = scmp.eq.s32.totalorder %s34, 0
      %p438 = por %p436, %p437
      %p439 = scmp.ne.s32.totalorder %s427, %s428
      %p440 = scmp.eq.s32.totalorder %s35, 1
      %p441 = por %p439, %p440
      %p443 = scmp.ne.s32.totalorder %s428, %s442
      %p444 = scmp.eq.s32.totalorder %s35, 0
      %p445 = por %p443, %p444
      %s447 = sadd.s32 %s446, 1
      %p450 = scmp.eq.s32.totalorder %s29, 1
      %p451 = scmp.ne.s32.totalorder %s446, %s448
      %p452 = scmp.eq.s32.totalorder %s29, 0
      %p453 = por %p451, %p452
      %p454 = scmp.ne.s32.totalorder %s446, %s448
      %p455 = scmp.eq.s32.totalorder %s34, 1
      %p456 = por %p454, %p455
      %p457 = scmp.ne.s32.totalorder %s448, %s449
      %p458 = scmp.eq.s32.totalorder %s34, 0
      %p459 = por %p457, %p458
      %p460 = scmp.ne.s32.totalorder %s448, %s449
      %p461 = scmp.eq.s32.totalorder %s35, 1
      %p462 = por %p460, %p461
      %p464 = scmp.ne.s32.totalorder %s449, %s463
      %p465 = scmp.eq.s32.totalorder %s35, 0
      %p466 = por %p464, %p465
      %s467 = ssub.s32 %s29, %s36
      %p468 = scmp.eq.s32.totalorder %s467, 0
      %s470 = sadd.s32 %s469, 1
      %s471 = scalar_select %p468, %s469, %s470
      %p474 = pneg %p468
      %p475 = scmp.eq.s32.totalorder %s29, 1
      %p476 = por %p474, %p475
      %p477 = scmp.ne.s32.totalorder %s469, %s472
      %p478 = scmp.eq.s32.totalorder %s29, 0
      %p479 = por %p477, %p478
      %p480 = scmp.ne.s32.totalorder %s469, %s472
      %p481 = scmp.eq.s32.totalorder %s34, 1
      %p482 = por %p480, %p481
      %p483 = scmp.ne.s32.totalorder %s472, %s473
      %p484 = scmp.eq.s32.totalorder %s34, 0
      %p485 = por %p483, %p484
      %p486 = scmp.ne.s32.totalorder %s472, %s473
      %p487 = scmp.eq.s32.totalorder %s35, 1
      %p488 = por %p486, %p487
      %p490 = scmp.ne.s32.totalorder %s473, %s489
      %p491 = scmp.eq.s32.totalorder %s35, 0
      %p492 = por %p490, %p491
      %p493 = scmp.le.s32.totalorder 1, %s29
      %p494 = scmp.lt.s32.totalorder %s29, 3
      %p495 = pnand %p493, %p494
      %p496 = pneg %p495
      // Predicated region
      $region9: #{_lambda_.1} parent=5 // pred_check
        _
      $region10: #{_lambda_.1} parent=5 // pred_check_branch
        %498 = sbr.rel (%p495) target = $region12
      $region11: #{_lambda_.1} parent=5 // pred_region
        %s499 = ssub.s32 %s29, 1
        // Predicated region
        $region13: #{_lambda_.1} parent=11 // pred_check
          %p500 = pneg %p102
        $region14: #{_lambda_.1} parent=11 // pred_check_branch
          %502 = sbr.rel (%p500) target = $region16
        $region15: #{_lambda_.1} parent=11 // pred_region
          _
        $region16: #{_lambda_.1} parent=11 // pred_fallthru
          _
        // Predicated region
        $region17: #{_lambda_.1} parent=11 // pred_check
          %p503 = pneg %p123
        $region18: #{_lambda_.1} parent=11 // pred_check_branch
          %505 = sbr.rel (%p503) target = $region20
        $region19: #{_lambda_.1} parent=11 // pred_region
          _
        $region20: #{_lambda_.1} parent=11 // pred_fallthru
          _
        // Predicated region
        $region21: #{_lambda_.1} parent=11 // pred_check
          %p506 = pneg %p144
        $region22: #{_lambda_.1} parent=11 // pred_check_branch
          %508 = sbr.rel (%p506) target = $region24
        $region23: #{_lambda_.1} parent=11 // pred_region
          _
        $region24: #{_lambda_.1} parent=11 // pred_fallthru
          _
        // Predicated region
        $region25: #{_lambda_.1} parent=11 // pred_check
          %p509 = pneg %p165
        $region26: #{_lambda_.1} parent=11 // pred_check_branch
          %511 = sbr.rel (%p509) target = $region28
        $region27: #{_lambda_.1} parent=11 // pred_region
          _
        $region28: #{_lambda_.1} parent=11 // pred_fallthru
          _
        // Predicated region
        $region29: #{_lambda_.1} parent=11 // pred_check
          %p512 = pneg %p186
        $region30: #{_lambda_.1} parent=11 // pred_check_branch
          %514 = sbr.rel (%p512) target = $region32
        $region31: #{_lambda_.1} parent=11 // pred_region
          _
        $region32: #{_lambda_.1} parent=11 // pred_fallthru
          _
        // Predicated region
        $region33: #{_lambda_.1} parent=11 // pred_check
          %p515 = pneg %p207
        $region34: #{_lambda_.1} parent=11 // pred_check_branch
          %517 = sbr.rel (%p515) target = $region36
        $region35: #{_lambda_.1} parent=11 // pred_region
          _
        $region36: #{_lambda_.1} parent=11 // pred_fallthru
          _
        // Predicated region
        $region37: #{_lambda_.1} parent=11 // pred_check
          %p518 = pneg %p228
        $region38: #{_lambda_.1} parent=11 // pred_check_branch
          %520 = sbr.rel (%p518) target = $region40
        $region39: #{_lambda_.1} parent=11 // pred_region
          _
        $region40: #{_lambda_.1} parent=11 // pred_fallthru
          _
        // Predicated region
        $region41: #{_lambda_.1} parent=11 // pred_check
          %p521 = pneg %p249
        $region42: #{_lambda_.1} parent=11 // pred_check_branch
          %523 = sbr.rel (%p521) target = $region44
        $region43: #{_lambda_.1} parent=11 // pred_region
          _
        $region44: #{_lambda_.1} parent=11 // pred_fallthru
          _
        // Predicated region
        $region45: #{_lambda_.1} parent=11 // pred_check
          %p524 = pneg %p270
        $region46: #{_lambda_.1} parent=11 // pred_check_branch
          %526 = sbr.rel (%p524) target = $region48
        $region47: #{_lambda_.1} parent=11 // pred_region
          _
        $region48: #{_lambda_.1} parent=11 // pred_fallthru
          _
        // Predicated region
        $region49: #{_lambda_.1} parent=11 // pred_check
          %p527 = pneg %p291
        $region50: #{_lambda_.1} parent=11 // pred_check_branch
          %529 = sbr.rel (%p527) target = $region52
        $region51: #{_lambda_.1} parent=11 // pred_region
          _
        $region52: #{_lambda_.1} parent=11 // pred_fallthru
          _
        // Predicated region
        $region53: #{_lambda_.1} parent=11 // pred_check
          %p530 = pneg %p312
        $region54: #{_lambda_.1} parent=11 // pred_check_branch
          %532 = sbr.rel (%p530) target = $region56
        $region55: #{_lambda_.1} parent=11 // pred_region
          _
        $region56: #{_lambda_.1} parent=11 // pred_fallthru
          _
        // Predicated region
        $region57: #{_lambda_.1} parent=11 // pred_check
          %p533 = pneg %p333
        $region58: #{_lambda_.1} parent=11 // pred_check_branch
          %535 = sbr.rel (%p533) target = $region60
        $region59: #{_lambda_.1} parent=11 // pred_region
          _
        $region60: #{_lambda_.1} parent=11 // pred_fallthru
          _
        // Predicated region
        $region61: #{_lambda_.1} parent=11 // pred_check
          %p536 = pneg %p354
        $region62: #{_lambda_.1} parent=11 // pred_check_branch
          %538 = sbr.rel (%p536) target = $region64
        $region63: #{_lambda_.1} parent=11 // pred_region
          _
        $region64: #{_lambda_.1} parent=11 // pred_fallthru
          _
        // Predicated region
        $region65: #{_lambda_.1} parent=11 // pred_check
          %p539 = pneg %p375
        $region66: #{_lambda_.1} parent=11 // pred_check_branch
          %541 = sbr.rel (%p539) target = $region68
        $region67: #{_lambda_.1} parent=11 // pred_region
          _
        $region68: #{_lambda_.1} parent=11 // pred_fallthru
          _
        // Predicated region
        $region69: #{_lambda_.1} parent=11 // pred_check
          %p542 = pneg %p396
        $region70: #{_lambda_.1} parent=11 // pred_check_branch
          %544 = sbr.rel (%p542) target = $region72
        $region71: #{_lambda_.1} parent=11 // pred_region
          _
        $region72: #{_lambda_.1} parent=11 // pred_fallthru
          _
        // Predicated region
        $region73: #{_lambda_.1} parent=11 // pred_check
          %p545 = pneg %p417
        $region74: #{_lambda_.1} parent=11 // pred_check_branch
          %547 = sbr.rel (%p545) target = $region76
        $region75: #{_lambda_.1} parent=11 // pred_region
          _
        $region76: #{_lambda_.1} parent=11 // pred_fallthru
          _
        // Predicated region
        $region77: #{_lambda_.1} parent=11 // pred_check
          %p548 = pneg %p438
        $region78: #{_lambda_.1} parent=11 // pred_check_branch
          %550 = sbr.rel (%p548) target = $region80
        $region79: #{_lambda_.1} parent=11 // pred_region
          _
        $region80: #{_lambda_.1} parent=11 // pred_fallthru
          _
        // Predicated region
        $region81: #{_lambda_.1} parent=11 // pred_check
          %p551 = pneg %p459
        $region82: #{_lambda_.1} parent=11 // pred_check_branch
          %553 = sbr.rel (%p551) target = $region84
        $region83: #{_lambda_.1} parent=11 // pred_region
          _
        $region84: #{_lambda_.1} parent=11 // pred_fallthru
          _
      $region12: #{_lambda_.1} parent=5 // pred_fallthru
        _
      %p554 = scmp.lt.s32.totalorder %s29, 2
      // Predicated region
      $region85: #{_lambda_.1} parent=5 // pred_check
        %p555 = pneg %p554
      $region86: #{_lambda_.1} parent=5 // pred_check_branch
        %557 = sbr.rel (%p555) target = $region88
      $region87: #{_lambda_.1} parent=5 // pred_region
        // Predicated region
        $region89: #{_lambda_.1} parent=87 // pred_check
          %p558 = pneg %p49
        $region90: #{_lambda_.1} parent=87 // pred_check_branch
          %560 = sbr.rel (%p558) target = $region92
        $region91: #{_lambda_.1} parent=87 // pred_region
          %p561 = scmp.lt.s32.totalorder %s29, 1
          %s562 = scalar_select %p561, %s29, 1
          %s563 = smul.addr %s562, 4
          %s564 = scalar_lea.vmem %s0, %s563
        $region92: #{_lambda_.1} parent=87 // pred_fallthru
          _
        // Predicated region
        $region93: #{_lambda_.1} parent=87 // pred_check
          %p565 = pneg %p75
        $region94: #{_lambda_.1} parent=87 // pred_check_branch
          %567 = sbr.rel (%p565) target = $region96
        $region95: #{_lambda_.1} parent=87 // pred_region
          %p568 = scmp.lt.s32.totalorder %s29, 1
          %s569 = scalar_select %p568, %s29, 1
          %s570 = scalar_lea.vmem %s1, %s569
        $region96: #{_lambda_.1} parent=87 // pred_fallthru
          _
      $region88: #{_lambda_.1} parent=5 // pred_fallthru
        _
      %p571 = scmp.le.s32.totalorder 1, %s29
      %p572 = scmp.lt.s32.totalorder %s29, 3
      %p573 = pnand %p571, %p572
      %p574 = pneg %p573
      // Predicated region
      $region97: #{_lambda_.1} parent=5 // pred_check
        _
      $region98: #{_lambda_.1} parent=5 // pred_check_branch
        %576 = sbr.rel (%p573) target = $region100
      $region99: #{_lambda_.1} parent=5 // pred_region
        %s577 = ssub.s32 %s29, 1
        %p578 = scmp.lt.s32.totalorder %s34, 1
        %s579 = scalar_select %p578, %s34, 1
        %s580 = smul.addr %s579, 4
        %s581 = scalar_lea.vmem %s0, %s580
        %p582 = pneg %p55
        %p583 = pneg %p52
        %p584 = scmp.lt.s32.totalorder %s34, 1
        %s585 = scalar_select %p584, %s34, 1
        %s586 = scalar_lea.vmem %s1, %s585
        %p587 = pneg %p81
        %p588 = pneg %p78
        %p589 = pneg %p102
        %p590 = pneg %p99
        %p591 = pneg %p123
        %p592 = pneg %p120
        %p593 = pneg %p144
        %p594 = pneg %p141
        %p595 = pneg %p165
        %p596 = pneg %p162
        %p597 = pneg %p186
        %p598 = pneg %p183
        %p599 = pneg %p207
        %p600 = pneg %p204
        %p601 = pneg %p228
        %p602 = pneg %p225
        %p603 = pneg %p249
        %p604 = pneg %p246
        %p605 = pneg %p270
        %p606 = pneg %p267
        %p607 = pneg %p291
        %p608 = pneg %p288
        %p609 = pneg %p312
        %p610 = pneg %p309
        %p611 = pneg %p333
        %p612 = pneg %p330
        %p613 = pneg %p354
        %p614 = pneg %p351
        %p615 = pneg %p375
        %p616 = pneg %p372
        %p617 = pneg %p396
        %p618 = pneg %p393
        %p619 = pneg %p417
        %p620 = pneg %p414
        %p621 = pneg %p438
        %p622 = pneg %p435
        %p623 = pneg %p459
        %p624 = pneg %p456
        %p625 = pneg %p485
        %p626 = pneg %p482
        %s627 = sand.u32 %s472, 1
        %s628 = scalar_lea.sflag [#allocation3], %s627
        %s629 = sand.u32 %s472, 1
        %s630 = scalar_lea.vmem [#allocation2], %s629
        %p631 = scmp.lt.s32.totalorder %s34, 1
        %s632 = scalar_select %p631, %s34, 1
        %s633 = smul.addr %s632, 4
        %s634 = scalar_lea.vmem %s0, %s633
        %p635 = scmp.lt.s32.totalorder %s34, 1
        %s636 = scalar_select %p635, %s34, 1
        %s637 = scalar_lea.vmem %s1, %s636
        %v639 = vld [vmem:[%s634] sm:$0xf]
        %v640 = vunpack.c.l.bf16 %v639
        %v641 = vld [vmem:[%s637] sm:$0x1]
        %v642 = vld [vmem:[%s2] sm:$0x1]
        %v643 = vld [vmem:[%s3] sm:$0x1]
        %vm644 = vcmask 261120
        %v645 = vsel %vm644, %v640, 0.0
        %646 = vadd.xlane.f32.xlu0 %v645
        %v647 = vpop.xlane.xlu0 %646
        %v648 = vrcp.pop 32.0
        %v649 = vmul.f32 32.0, %v648
        %v650 = vsub.f32 1.0, %v649
        %v651 = vmul.f32 %v648, %v650
        %v652 = vadd.f32 %v648, %v651
        %vm653 = vweird.f32 %v648
        %v654 = vsel %vm653, %v648, %v652
        %v655 = vmul.f32 %v647, %v654
        %v656 = vsub.f32 %v640, %v655
        %v657 = vmul.f32 %v656, %v656
        %v658 = vsel %vm644, %v657, 0.0
        %659 = vadd.xlane.f32.xlu0 %v658
        %v660 = vpop.xlane.xlu0 %659
        %v661 = vmul.f32 %v660, %v654
        %v662 = vadd.f32 %v661, 1e-05
        %v663 = vrsqrt.pop %v662
        %v664 = vmul.f32 %v663, %v662
        %v665 = vmul.f32 %v664, %v663
        %v666 = vmul.f32 0.5, %v665
        %v667 = vsub.f32 1.5, %v666
        %v668 = vmul.f32 %v663, %v667
        %vm669 = vweird.f32 %v662
        %vm670 = vweird.f32 %v663
        %vm671 = vmor %vm669, %vm670
        %v672 = vsel %vm671, %v663, %v668
        %v673 = vmul.f32 %v656, %v672
        %v675 = vperm.slane %v642, 0
        %v677 = vmul.f32 %v673, %v675
        %v679 = vperm.slane %v643, 0
        %v681 = vadd.f32 %v677, %v679
        %v682 = vld [vmem:[%s4] sm:$0xf]
        %v683 = vld [vmem:[%s4 + $0x4] sm:$0xf]
        %v684 = vld [vmem:[%s4 + $0x8] sm:$0xf]
        %v685 = vld [vmem:[%s4 + $0xc] sm:$0xf]
        %v686 = vld [vmem:[%s5] sm:$0x1]
        %v687 = vpack.c.bf16 %v681, %v681
        %v689 = vperm.slane %v686, 0
        %v695 = vunpack.c.l.b16 %v682
        %v696 = vunpack.c.l.b16 %v683
        %v697 = vunpack.c.l.b16 %v684
        %v698 = vunpack.c.l.b16 %v685
        %v699 = vpack.c.b16 %v696, %v695
        %v700 = vpack.c.b16 %v698, %v697
        %v704 = vsel %vm644, %v687, 0
        %706 = vmatpush.bf16.msra.mxu0 0
        %707 = vmatpush.bf16.msra.mxu0 0
        %708 = vmatpush.bf16.msra.mxu0 0
        %709 = vmatpush.bf16.msra.mxu0 0
        %710 = vmatpush.bf16.msra.mxu0 0
        %711 = vmatpush.bf16.msra.mxu0 0
        %712 = vmatpush.bf16.msra.mxu0 %v700
        %713 = vmatpush.bf16.msra.mxu0 %v699
        %714 = vmatmul.bf16.gmra.mxu0 %v704
        %v715 = vpop.f32.mrf.mxu0
        %v716 = vadd.f32 %v689, %v715
        %v717 = vpop.f32.mrf.mxu0
        %718 = vdwg.mxu0
        %720 = vrot.lane.b32.xlu0 %v716, 96
        %v721 = vpop.permute.xlu0 %720
        %vm722 = vcmask 64512
        %v723 = vsel %vm722, %v716, 0
        %v725 = vsel %vm722, %v721, 0
        %727 = vmatpush.xpose.msra.mxu0 0.0
        %728 = vmatpush.xpose.msra.mxu0 0.0
        %729 = vmatpush.xpose.msra.mxu0 0.0
        %730 = vmatpush.xpose.msra.mxu0 0.0
        %731 = vmatpush.xpose.msra.mxu0 0.0
        %732 = vmatpush.xpose.msra.mxu0 0.0
        %733 = vmatpush.xpose.msra.mxu0 0.0
        %734 = vmatpush.xpose.msra.mxu0 0.0
        %735 = vmatpush.xpose.msra.mxu0 0.0
        %736 = vmatpush.xpose.msra.mxu0 0.0
        %737 = vmatpush.xpose.msra.mxu0 0.0
        %738 = vmatpush.xpose.msra.mxu0 0.0
        %739 = vmatpush.xpose.msra.mxu0 0.0
        %740 = vmatpush.xpose.msra.mxu0 0.0
        %741 = vmatpush.xpose.msra.mxu0 0.0
        %742 = vmatpush.xpose.msra.mxu0 %v725
        %743 = vmatmul.f32.gmra.mxu0 %v723
        %v744 = vpop.f32.mrf.mxu0
        %v745 = vadd.f32 0.0, %v744
        %746 = vdwg.mxu0
        %v747 = vmul.f32 %v745, 0.35355338
        %v749 = vperm.slane %v641, 0
        %v751 = vadd.f32 %v747, %v749
        %v752 = vsel %vm722, %v751, -inf
        %753 = vmax.xlane.f32.xlu0 %v752
        %v754 = vpop.xlane.xlu0 %753
        %v755 = vsub.f32 %v751, %v754
        %v756 = vmul.f32 %v755, 1.442695
        %v757 = vpow.pop %v756
        %v758 = vsel %vm722, %v757, 0.0
        %759 = vadd.xlane.f32.xlu0 %v758
        %v760 = vpop.xlane.xlu0 %759
        %v761 = vrcp.pop %v760
        %v762 = vmul.f32 %v760, %v761
        %v763 = vsub.f32 1.0, %v762
        %v764 = vmul.f32 %v761, %v763
        %v765 = vadd.f32 %v761, %v764
        %vm766 = vweird.f32 %v760
        %vm767 = vweird.f32 %v761
        %vm768 = vmor %vm766, %vm767
        %v769 = vsel %vm768, %v761, %v765
        %v770 = vand.u32 2147483647, %v760
        %vm771 = vcmp.eq.f32.partialorder %v770, 8.507059e+37
        %v772 = vand.u32 %v760, 2147483648
        %v773 = vor.u32 1.1754944e-38, %v772
        %v774 = vsel %vm771, %v773, %v769
        %v775 = vmul.f32 %v757, %v774
        %776 = vrot.lane.b32.xlu0 %v716, 64
        %v777 = vpop.permute.xlu0 %776
        %v780 = vsel %vm722, %v775, 0
        %782 = vmatpush.msra.mxu0 0.0
        %783 = vmatpush.msra.mxu0 0.0
        %784 = vmatpush.msra.mxu0 0.0
        %785 = vmatpush.msra.mxu0 0.0
        %786 = vmatpush.msra.mxu0 0.0
        %787 = vmatpush.msra.mxu0 0.0
        %788 = vmatpush.msra.mxu0 0.0
        %789 = vmatpush.msra.mxu0 0.0
        %790 = vmatpush.msra.mxu0 0.0
        %791 = vmatpush.msra.mxu0 0.0
        %792 = vmatpush.msra.mxu0 0.0
        %793 = vmatpush.msra.mxu0 0.0
        %794 = vmatpush.msra.mxu0 0.0
        %795 = vmatpush.msra.mxu0 0.0
        %796 = vmatpush.msra.mxu0 0.0
        %797 = vmatpush.msra.mxu0 %v777
        %798 = vmatmul.f32.gmra.mxu0 %v780
        %v799 = vpop.f32.mrf.mxu0
        %v800 = vadd.f32 0.0, %v799
        %801 = vdwg.mxu0
        %802 = vrot.lane.b32.xlu0 %v716, 120
        %v803 = vpop.permute.xlu0 %802
        %804 = vrot.lane.b32.xlu0 %v716, 88
        %v805 = vpop.permute.xlu0 %804
        %v806 = vsel %vm722, %v803, 0
        %v808 = vsel %vm722, %v805, 0
        %810 = vmatpush.xpose.msra.mxu0 0.0
        %811 = vmatpush.xpose.msra.mxu0 0.0
        %812 = vmatpush.xpose.msra.mxu0 0.0
        %813 = vmatpush.xpose.msra.mxu0 0.0
        %814 = vmatpush.xpose.msra.mxu0 0.0
        %815 = vmatpush.xpose.msra.mxu0 0.0
        %816 = vmatpush.xpose.msra.mxu0 0.0
        %817 = vmatpush.xpose.msra.mxu0 0.0
        %818 = vmatpush.xpose.msra.mxu0 0.0
        %819 = vmatpush.xpose.msra.mxu0 0.0
        %820 = vmatpush.xpose.msra.mxu0 0.0
        %821 = vmatpush.xpose.msra.mxu0 0.0
        %822 = vmatpush.xpose.msra.mxu0 0.0
        %823 = vmatpush.xpose.msra.mxu0 0.0
        %824 = vmatpush.xpose.msra.mxu0 0.0
        %825 = vmatpush.xpose.msra.mxu0 %v808
        %826 = vmatmul.f32.gmra.mxu0 %v806
        %v827 = vpop.f32.mrf.mxu0
        %v828 = vadd.f32 0.0, %v827
        %829 = vdwg.mxu0
        %v830 = vmul.f32 %v828, 0.35355338
        %v831 = vadd.f32 %v830, %v749
        %v832 = vsel %vm722, %v831, -inf
        %833 = vmax.xlane.f32.xlu0 %v832
        %v834 = vpop.xlane.xlu0 %833
        %v835 = vsub.f32 %v831, %v834
        %v836 = vmul.f32 %v835, 1.442695
        %v837 = vpow.pop %v836
        %v838 = vsel %vm722, %v837, 0.0
        %839 = vadd.xlane.f32.xlu0 %v838
        %v840 = vpop.xlane.xlu0 %839
        %v841 = vrcp.pop %v840
        %v842 = vmul.f32 %v840, %v841
        %v843 = vsub.f32 1.0, %v842
        %v844 = vmul.f32 %v841, %v843
        %v845 = vadd.f32 %v841, %v844
        %vm846 = vweird.f32 %v840
        %vm847 = vweird.f32 %v841
        %vm848 = vmor %vm846, %vm847
        %v849 = vsel %vm848, %v841, %v845
        %v850 = vand.u32 2147483647, %v840
        %vm851 = vcmp.eq.f32.partialorder %v850, 8.507059e+37
        %v852 = vand.u32 %v840, 2147483648
        %v853 = vor.u32 1.1754944e-38, %v852
        %v854 = vsel %vm851, %v853, %v849
        %v855 = vmul.f32 %v837, %v854
        %856 = vrot.lane.b32.xlu0 %v716, 56
        %v857 = vpop.permute.xlu0 %856
        %v860 = vsel %vm722, %v855, 0
        %862 = vmatpush.msra.mxu0 0.0
        %863 = vmatpush.msra.mxu0 0.0
        %864 = vmatpush.msra.mxu0 0.0
        %865 = vmatpush.msra.mxu0 0.0
        %866 = vmatpush.msra.mxu0 0.0
        %867 = vmatpush.msra.mxu0 0.0
        %868 = vmatpush.msra.mxu0 0.0
        %869 = vmatpush.msra.mxu0 0.0
        %870 = vmatpush.msra.mxu0 0.0
        %871 = vmatpush.msra.mxu0 0.0
        %872 = vmatpush.msra.mxu0 0.0
        %873 = vmatpush.msra.mxu0 0.0
        %874 = vmatpush.msra.mxu0 0.0
        %875 = vmatpush.msra.mxu0 0.0
        %876 = vmatpush.msra.mxu0 0.0
        %877 = vmatpush.msra.mxu0 %v857
        %878 = vmatmul.f32.gmra.mxu0 %v860
        %v879 = vpop.f32.mrf.mxu0
        %v880 = vadd.f32 0.0, %v879
        %881 = vdwg.mxu0
        %882 = vrot.lane.b32.xlu0 %v716, 112
        %v883 = vpop.permute.xlu0 %882
        %884 = vrot.lane.b32.xlu0 %v716, 80
        %v885 = vpop.permute.xlu0 %884
        %v886 = vsel %vm722, %v883, 0
        %v888 = vsel %vm722, %v885, 0
        %890 = vmatpush.xpose.msra.mxu0 0.0
        %891 = vmatpush.xpose.msra.mxu0 0.0
        %892 = vmatpush.xpose.msra.mxu0 0.0
        %893 = vmatpush.xpose.msra.mxu0 0.0
        %894 = vmatpush.xpose.msra.mxu0 0.0
        %895 = vmatpush.xpose.msra.mxu0 0.0
        %896 = vmatpush.xpose.msra.mxu0 0.0
        %897 = vmatpush.xpose.msra.mxu0 0.0
        %898 = vmatpush.xpose.msra.mxu0 0.0
        %899 = vmatpush.xpose.msra.mxu0 0.0
        %900 = vmatpush.xpose.msra.mxu0 0.0
        %901 = vmatpush.xpose.msra.mxu0 0.0
        %902 = vmatpush.xpose.msra.mxu0 0.0
        %903 = vmatpush.xpose.msra.mxu0 0.0
        %904 = vmatpush.xpose.msra.mxu0 0.0
        %905 = vmatpush.xpose.msra.mxu0 %v888
        %906 = vmatmul.f32.gmra.mxu0 %v886
        %v907 = vpop.f32.mrf.mxu0
        %v908 = vadd.f32 0.0, %v907
        %909 = vdwg.mxu0
        %v910 = vmul.f32 %v908, 0.35355338
        %v911 = vadd.f32 %v910, %v749
        %v912 = vsel %vm722, %v911, -inf
        %913 = vmax.xlane.f32.xlu0 %v912
        %v914 = vpop.xlane.xlu0 %913
        %v915 = vsub.f32 %v911, %v914
        %v916 = vmul.f32 %v915, 1.442695
        %v917 = vpow.pop %v916
        %v918 = vsel %vm722, %v917, 0.0
        %919 = vadd.xlane.f32.xlu0 %v918
        %v920 = vpop.xlane.xlu0 %919
        %v921 = vrcp.pop %v920
        %v922 = vmul.f32 %v920, %v921
        %v923 = vsub.f32 1.0, %v922
        %v924 = vmul.f32 %v921, %v923
        %v925 = vadd.f32 %v921, %v924
        %vm926 = vweird.f32 %v920
        %vm927 = vweird.f32 %v921
        %vm928 = vmor %vm926, %vm927
        %v929 = vsel %vm928, %v921, %v925
        %v930 = vand.u32 2147483647, %v920
        %vm931 = vcmp.eq.f32.partialorder %v930, 8.507059e+37
        %v932 = vand.u32 %v920, 2147483648
        %v933 = vor.u32 1.1754944e-38, %v932
        %v934 = vsel %vm931, %v933, %v929
        %v935 = vmul.f32 %v917, %v934
        %936 = vrot.lane.b32.xlu0 %v716, 48
        %v937 = vpop.permute.xlu0 %936
        %v940 = vsel %vm722, %v935, 0
        %942 = vmatpush.msra.mxu0 0.0
        %943 = vmatpush.msra.mxu0 0.0
        %944 = vmatpush.msra.mxu0 0.0
        %945 = vmatpush.msra.mxu0 0.0
        %946 = vmatpush.msra.mxu0 0.0
        %947 = vmatpush.msra.mxu0 0.0
        %948 = vmatpush.msra.mxu0 0.0
        %949 = vmatpush.msra.mxu0 0.0
        %950 = vmatpush.msra.mxu0 0.0
        %951 = vmatpush.msra.mxu0 0.0
        %952 = vmatpush.msra.mxu0 0.0
        %953 = vmatpush.msra.mxu0 0.0
        %954 = vmatpush.msra.mxu0 0.0
        %955 = vmatpush.msra.mxu0 0.0
        %956 = vmatpush.msra.mxu0 0.0
        %957 = vmatpush.msra.mxu0 %v937
        %958 = vmatmul.f32.gmra.mxu0 %v940
        %v959 = vpop.f32.mrf.mxu0
        %v960 = vadd.f32 0.0, %v959
        %961 = vdwg.mxu0
        %962 = vrot.lane.b32.xlu0 %v716, 104
        %v963 = vpop.permute.xlu0 %962
        %964 = vrot.lane.b32.xlu0 %v716, 72
        %v965 = vpop.permute.xlu0 %964
        %v966 = vsel %vm722, %v963, 0
        %v968 = vsel %vm722, %v965, 0
        %970 = vmatpush.xpose.msra.mxu0 0.0
        %971 = vmatpush.xpose.msra.mxu0 0.0
        %972 = vmatpush.xpose.msra.mxu0 0.0
        %973 = vmatpush.xpose.msra.mxu0 0.0
        %974 = vmatpush.xpose.msra.mxu0 0.0
        %975 = vmatpush.xpose.msra.mxu0 0.0
        %976 = vmatpush.xpose.msra.mxu0 0.0
        %977 = vmatpush.xpose.msra.mxu0 0.0
        %978 = vmatpush.xpose.msra.mxu0 0.0
        %979 = vmatpush.xpose.msra.mxu0 0.0
        %980 = vmatpush.xpose.msra.mxu0 0.0
        %981 = vmatpush.xpose.msra.mxu0 0.0
        %982 = vmatpush.xpose.msra.mxu0 0.0
        %983 = vmatpush.xpose.msra.mxu0 0.0
        %984 = vmatpush.xpose.msra.mxu0 0.0
        %985 = vmatpush.xpose.msra.mxu0 %v968
        %986 = vmatmul.f32.gmra.mxu0 %v966
        %v987 = vpop.f32.mrf.mxu0
        %v988 = vadd.f32 0.0, %v987
        %989 = vdwg.mxu0
        %v990 = vmul.f32 %v988, 0.35355338
        %v991 = vadd.f32 %v990, %v749
        %v992 = vsel %vm722, %v991, -inf
        %993 = vmax.xlane.f32.xlu0 %v992
        %v994 = vpop.xlane.xlu0 %993
        %v995 = vsub.f32 %v991, %v994
        %v996 = vmul.f32 %v995, 1.442695
        %v997 = vpow.pop %v996
        %v998 = vsel %vm722, %v997, 0.0
        %999 = vadd.xlane.f32.xlu0 %v998
        %v1000 = vpop.xlane.xlu0 %999
        %v1001 = vrcp.pop %v1000
        %v1002 = vmul.f32 %v1000, %v1001
        %v1003 = vsub.f32 1.0, %v1002
        %v1004 = vmul.f32 %v1001, %v1003
        %v1005 = vadd.f32 %v1001, %v1004
        %vm1006 = vweird.f32 %v1000
        %vm1007 = vweird.f32 %v1001
        %vm1008 = vmor %vm1006, %vm1007
        %v1009 = vsel %vm1008, %v1001, %v1005
        %v1010 = vand.u32 2147483647, %v1000
        %vm1011 = vcmp.eq.f32.partialorder %v1010, 8.507059e+37
        %v1012 = vand.u32 %v1000, 2147483648
        %v1013 = vor.u32 1.1754944e-38, %v1012
        %v1014 = vsel %vm1011, %v1013, %v1009
        %v1015 = vmul.f32 %v997, %v1014
        %1016 = vrot.lane.b32.xlu0 %v716, 40
        %v1017 = vpop.permute.xlu0 %1016
        %v1020 = vsel %vm722, %v1015, 0
        %1022 = vmatpush.msra.mxu0 0.0
        %1023 = vmatpush.msra.mxu0 0.0
        %1024 = vmatpush.msra.mxu0 0.0
        %1025 = vmatpush.msra.mxu0 0.0
        %1026 = vmatpush.msra.mxu0 0.0
        %1027 = vmatpush.msra.mxu0 0.0
        %1028 = vmatpush.msra.mxu0 0.0
        %1029 = vmatpush.msra.mxu0 0.0
        %1030 = vmatpush.msra.mxu0 0.0
        %1031 = vmatpush.msra.mxu0 0.0
        %1032 = vmatpush.msra.mxu0 0.0
        %1033 = vmatpush.msra.mxu0 0.0
        %1034 = vmatpush.msra.mxu0 0.0
        %1035 = vmatpush.msra.mxu0 0.0
        %1036 = vmatpush.msra.mxu0 0.0
        %1037 = vmatpush.msra.mxu0 %v1017
        %1038 = vmatmul.f32.gmra.mxu0 %v1020
        %v1039 = vpop.f32.mrf.mxu0
        %v1040 = vadd.f32 0.0, %v1039
        %1041 = vdwg.mxu0
        %1043 = vrot.lane.b32.xlu0 %v880, 8
        %v1044 = vpop.permute.xlu0 %1043
        %1047 = vrot.lane.b32.xlu0 %v960, 16
        %v1048 = vpop.permute.xlu0 %1047
        %1051 = vrot.lane.b32.xlu0 %v1040, 24
        %v1052 = vpop.permute.xlu0 %1051
        %v1054 = vsel %vm722, %v800, %v1044
        %vm1055 = vcmask 130048
        %v1056 = vsel %vm1055, %v1054, %v1048
        %vm1057 = vcmask 195584
        %v1058 = vsel %vm1057, %v1056, %v1052
        %v1059 = vld [vmem:[%s6] sm:$0xf]
        %v1060 = vld [vmem:[%s6 + $0x4] sm:$0xf]
        %v1061 = vld [vmem:[%s6 + $0x8] sm:$0xf]
        %v1062 = vld [vmem:[%s6 + $0xc] sm:$0xf]
        %v1063 = vld [vmem:[%s7] sm:$0x1]
        %v1064 = vpack.c.bf16 %v1058, %v1058
        %v1066 = vperm.slane %v1063, 0
        %v1072 = vunpack.c.l.b16 %v1059
        %v1073 = vunpack.c.l.b16 %v1060
        %v1074 = vunpack.c.l.b16 %v1061
        %v1075 = vunpack.c.l.b16 %v1062
        %v1076 = vpack.c.b16 %v1073, %v1072
        %v1077 = vpack.c.b16 %v1075, %v1074
        %v1081 = vsel %vm644, %v1064, 0
        %1083 = vmatpush.bf16.msra.mxu0 0
        %1084 = vmatpush.bf16.msra.mxu0 0
        %1085 = vmatpush.bf16.msra.mxu0 0
        %1086 = vmatpush.bf16.msra.mxu0 0
        %1087 = vmatpush.bf16.msra.mxu0 0
        %1088 = vmatpush.bf16.msra.mxu0 0
        %1089 = vmatpush.bf16.msra.mxu0 %v1077
        %1090 = vmatpush.bf16.msra.mxu0 %v1076
        %1091 = vmatmul.bf16.gmra.mxu0 %v1081
        %v1092 = vpop.f32.mrf.mxu0
        %v1093 = vadd.f32 %v1066, %v1092
        %v1094 = vpop.f32.mrf.mxu0
        %1095 = vdwg.mxu0
        %v1096 = vadd.f32 %v1093, %v681
        %v1097 = vld [vmem:[%s8] sm:$0x1]
        %v1098 = vld [vmem:[%s9] sm:$0x1]
        %v1099 = vsel %vm644, %v1096, 0.0
        %1100 = vadd.xlane.f32.xlu0 %v1099
        %v1101 = vpop.xlane.xlu0 %1100
        %v1102 = vmul.f32 %v1101, %v654
        %v1103 = vsub.f32 %v1096, %v1102
        %v1104 = vmul.f32 %v1103, %v1103
        %v1105 = vsel %vm644, %v1104, 0.0
        %1106 = vadd.xlane.f32.xlu0 %v1105
        %v1107 = vpop.xlane.xlu0 %1106
        %v1108 = vmul.f32 %v1107, %v654
        %v1109 = vadd.f32 %v1108, 1e-05
        %v1110 = vrsqrt.pop %v1109
        %v1111 = vmul.f32 %v1110, %v1109
        %v1112 = vmul.f32 %v1111, %v1110
        %v1113 = vmul.f32 0.5, %v1112
        %v1114 = vsub.f32 1.5, %v1113
        %v1115 = vmul.f32 %v1110, %v1114
        %vm1116 = vweird.f32 %v1109
        %vm1117 = vweird.f32 %v1110
        %vm1118 = vmor %vm1116, %vm1117
        %v1119 = vsel %vm1118, %v1110, %v1115
        %v1120 = vmul.f32 %v1103, %v1119
        %v1122 = vperm.slane %v1097, 0
        %v1124 = vmul.f32 %v1120, %v1122
        %v1126 = vperm.slane %v1098, 0
        %v1128 = vadd.f32 %v1124, %v1126
        %v1129 = vld [vmem:[%s10] sm:$0xf]
        %v1130 = vld [vmem:[%s10 + $0x4] sm:$0xf]
        %v1131 = vld [vmem:[%s10 + $0x8] sm:$0xf]
        %v1132 = vld [vmem:[%s10 + $0xc] sm:$0xf]
        %v1133 = vld [vmem:[%s11] sm:$0x1]
        %v1134 = vpack.c.bf16 %v1128, %v1128
        %v1136 = vperm.slane %v1133, 0
        %v1142 = vunpack.c.l.b16 %v1129
        %v1143 = vunpack.c.l.b16 %v1130
        %v1144 = vunpack.c.l.b16 %v1131
        %v1145 = vunpack.c.l.b16 %v1132
        %v1146 = vpack.c.b16 %v1143, %v1142
        %v1147 = vpack.c.b16 %v1145, %v1144
        %v1151 = vsel %vm644, %v1134, 0
        %1153 = vmatpush.bf16.msra.mxu0 0
        %1154 = vmatpush.bf16.msra.mxu0 0
        %1155 = vmatpush.bf16.msra.mxu0 0
        %1156 = vmatpush.bf16.msra.mxu0 0
        %1157 = vmatpush.bf16.msra.mxu0 0
        %1158 = vmatpush.bf16.msra.mxu0 0
        %1159 = vmatpush.bf16.msra.mxu0 %v1147
        %1160 = vmatpush.bf16.msra.mxu0 %v1146
        %1161 = vmatmul.bf16.gmra.mxu0 %v1151
        %v1162 = vpop.f32.mrf.mxu0
        %v1163 = vadd.f32 %v1136, %v1162
        %v1164 = vpop.f32.mrf.mxu0
        %1165 = vdwg.mxu0
        %v1166 = vmul.f32 %v1163, %v1163
        %v1167 = vmul.f32 %v1163, %v1166
        %v1168 = vmul.f32 %v1167, 0.044715
        %v1169 = vadd.f32 %v1163, %v1168
        %v1170 = vmul.f32 %v1169, 0.7978846
        %v1171 = vtanh.pop %v1170
        %v1172 = vadd.f32 %v1171, 1.0
        %v1173 = vmul.f32 %v1172, 0.5
        %v1174 = vmul.f32 %v1163, %v1173
        %v1175 = vld [vmem:[%s12] sm:$0xf]
        %v1176 = vld [vmem:[%s12 + $0x4] sm:$0xf]
        %v1177 = vld [vmem:[%s12 + $0x8] sm:$0xf]
        %v1178 = vld [vmem:[%s12 + $0xc] sm:$0xf]
        %v1179 = vld [vmem:[%s12 + $0x10] sm:$0xf]
        %v1180 = vld [vmem:[%s12 + $0x14] sm:$0xf]
        %v1181 = vld [vmem:[%s12 + $0x18] sm:$0xf]
        %v1182 = vld [vmem:[%s12 + $0x1c] sm:$0xf]
        %v1183 = vld [vmem:[%s13] sm:$0x1]
        %v1184 = vpack.c.bf16 %v1174, %v1174
        %v1186 = vperm.slane %v1183, 0
        %v1196 = vunpack.c.l.b16 %v1175
        %v1197 = vunpack.c.l.b16 %v1176
        %v1198 = vunpack.c.l.b16 %v1177
        %v1199 = vunpack.c.l.b16 %v1178
        %v1200 = vunpack.c.l.b16 %v1179
        %v1201 = vunpack.c.l.b16 %v1180
        %v1202 = vunpack.c.l.b16 %v1181
        %v1203 = vunpack.c.l.b16 %v1182
        %v1204 = vpack.c.b16 %v1197, %v1196
        %v1205 = vpack.c.b16 %v1199, %v1198
        %v1206 = vpack.c.b16 %v1201, %v1200
        %v1207 = vpack.c.b16 %v1203, %v1202
        %vm1212 = vcmask 523264
        %v1214 = vsel %vm1212, %v1184, 0
        %1216 = vmatpush.bf16.msra.mxu0 0
        %1217 = vmatpush.bf16.msra.mxu0 0
        %1218 = vmatpush.bf16.msra.mxu0 0
        %1219 = vmatpush.bf16.msra.mxu0 0
        %1220 = vmatpush.bf16.msra.mxu0 %v1207
        %1221 = vmatpush.bf16.msra.mxu0 %v1206
        %1222 = vmatpush.bf16.msra.mxu0 %v1205
        %1223 = vmatpush.bf16.msra.mxu0 %v1204
        %1224 = vmatmul.bf16.gmra.mxu0 %v1214
        %v1225 = vpop.f32.mrf.mxu0
        %v1226 = vadd.f32 %v1186, %v1225
        %v1227 = vpop.f32.mrf.mxu0
        %1228 = vdwg.mxu0
        %v1229 = vadd.f32 %v1226, %v1128
        %v1230 = vld [vmem:[%s14] sm:$0x1]
        %v1231 = vld [vmem:[%s15] sm:$0x1]
        %v1232 = vsel %vm644, %v1229, 0.0
        %1233 = vadd.xlane.f32.xlu0 %v1232
        %v1234 = vpop.xlane.xlu0 %1233
        %v1235 = vmul.f32 %v1234, %v654
        %v1236 = vsub.f32 %v1229, %v1235
        %v1237 = vmul.f32 %v1236, %v1236
        %v1238 = vsel %vm644, %v1237, 0.0
        %1239 = vadd.xlane.f32.xlu0 %v1238
        %v1240 = vpop.xlane.xlu0 %1239
        %v1241 = vmul.f32 %v1240, %v654
        %v1242 = vadd.f32 %v1241, 1e-05
        %v1243 = vrsqrt.pop %v1242
        %v1244 = vmul.f32 %v1243, %v1242
        %v1245 = vmul.f32 %v1244, %v1243
        %v1246 = vmul.f32 0.5, %v1245
        %v1247 = vsub.f32 1.5, %v1246
        %v1248 = vmul.f32 %v1243, %v1247
        %vm1249 = vweird.f32 %v1242
        %vm1250 = vweird.f32 %v1243
        %vm1251 = vmor %vm1249, %vm1250
        %v1252 = vsel %vm1251, %v1243, %v1248
        %v1253 = vmul.f32 %v1236, %v1252
        %v1255 = vperm.slane %v1230, 0
        %v1257 = vmul.f32 %v1253, %v1255
        %v1259 = vperm.slane %v1231, 0
        %v1261 = vadd.f32 %v1257, %v1259
        %s1262 = scalar_lea.vmem %s4, 16
        %v1263 = vld [vmem:[%s1262] sm:$0xf]
        %v1264 = vld [vmem:[%s1262 + $0x4] sm:$0xf]
        %v1265 = vld [vmem:[%s1262 + $0x8] sm:$0xf]
        %v1266 = vld [vmem:[%s1262 + $0xc] sm:$0xf]
        %s1267 = scalar_lea.vmem %s5, 1
        %v1268 = vld [vmem:[%s1267] sm:$0x1]
        %v1269 = vpack.c.bf16 %v1261, %v1261
        %v1271 = vperm.slane %v1268, 0
        %v1277 = vunpack.c.l.b16 %v1263
        %v1278 = vunpack.c.l.b16 %v1264
        %v1279 = vunpack.c.l.b16 %v1265
        %v1280 = vunpack.c.l.b16 %v1266
        %v1281 = vpack.c.b16 %v1278, %v1277
        %v1282 = vpack.c.b16 %v1280, %v1279
        %v1286 = vsel %vm644, %v1269, 0
        %1288 = vmatpush.bf16.msra.mxu0 0
        %1289 = vmatpush.bf16.msra.mxu0 0
        %1290 = vmatpush.bf16.msra.mxu0 0
        %1291 = vmatpush.bf16.msra.mxu0 0
        %1292 = vmatpush.bf16.msra.mxu0 0
        %1293 = vmatpush.bf16.msra.mxu0 0
        %1294 = vmatpush.bf16.msra.mxu0 %v1282
        %1295 = vmatpush.bf16.msra.mxu0 %v1281
        %1296 = vmatmul.bf16.gmra.mxu0 %v1286
        %v1297 = vpop.f32.mrf.mxu0
        %v1298 = vadd.f32 %v1271, %v1297
        %v1299 = vpop.f32.mrf.mxu0
        %1300 = vdwg.mxu0
        %1302 = vrot.lane.b32.xlu0 %v1298, 96
        %v1303 = vpop.permute.xlu0 %1302
        %v1304 = vsel %vm722, %v1298, 0
        %v1306 = vsel %vm722, %v1303, 0
        %1308 = vmatpush.xpose.msra.mxu0 0.0
        %1309 = vmatpush.xpose.msra.mxu0 0.0
        %1310 = vmatpush.xpose.msra.mxu0 0.0
        %1311 = vmatpush.xpose.msra.mxu0 0.0
        %1312 = vmatpush.xpose.msra.mxu0 0.0
        %1313 = vmatpush.xpose.msra.mxu0 0.0
        %1314 = vmatpush.xpose.msra.mxu0 0.0
        %1315 = vmatpush.xpose.msra.mxu0 0.0
        %1316 = vmatpush.xpose.msra.mxu0 0.0
        %1317 = vmatpush.xpose.msra.mxu0 0.0
        %1318 = vmatpush.xpose.msra.mxu0 0.0
        %1319 = vmatpush.xpose.msra.mxu0 0.0
        %1320 = vmatpush.xpose.msra.mxu0 0.0
        %1321 = vmatpush.xpose.msra.mxu0 0.0
        %1322 = vmatpush.xpose.msra.mxu0 0.0
        %1323 = vmatpush.xpose.msra.mxu0 %v1306
        %1324 = vmatmul.f32.gmra.mxu0 %v1304
        %v1325 = vpop.f32.mrf.mxu0
        %v1326 = vadd.f32 0.0, %v1325
        %1327 = vdwg.mxu0
        %v1328 = vmul.f32 %v1326, 0.35355338
        %v1329 = vadd.f32 %v1328, %v749
        %v1330 = vsel %vm722, %v1329, -inf
        %1331 = vmax.xlane.f32.xlu0 %v1330
        %v1332 = vpop.xlane.xlu0 %1331
        %v1333 = vsub.f32 %v1329, %v1332
        %v1334 = vmul.f32 %v1333, 1.442695
        %v1335 = vpow.pop %v1334
        %v1336 = vsel %vm722, %v1335, 0.0
        %1337 = vadd.xlane.f32.xlu0 %v1336
        %v1338 = vpop.xlane.xlu0 %1337
        %v1339 = vrcp.pop %v1338
        %v1340 = vmul.f32 %v1338, %v1339
        %v1341 = vsub.f32 1.0, %v1340
        %v1342 = vmul.f32 %v1339, %v1341
        %v1343 = vadd.f32 %v1339, %v1342
        %vm1344 = vweird.f32 %v1338
        %vm1345 = vweird.f32 %v1339
        %vm1346 = vmor %vm1344, %vm1345
        %v1347 = vsel %vm1346, %v1339, %v1343
        %v1348 = vand.u32 2147483647, %v1338
        %vm1349 = vcmp.eq.f32.partialorder %v1348, 8.507059e+37
        %v1350 = vand.u32 %v1338, 2147483648
        %v1351 = vor.u32 1.1754944e-38, %v1350
        %v1352 = vsel %vm1349, %v1351, %v1347
        %v1353 = vmul.f32 %v1335, %v1352
        %1354 = vrot.lane.b32.xlu0 %v1298, 64
        %v1355 = vpop.permute.xlu0 %1354
        %v1358 = vsel %vm722, %v1353, 0
        %1360 = vmatpush.msra.mxu0 0.0
        %1361 = vmatpush.msra.mxu0 0.0
        %1362 = vmatpush.msra.mxu0 0.0
        %1363 = vmatpush.msra.mxu0 0.0
        %1364 = vmatpush.msra.mxu0 0.0
        %1365 = vmatpush.msra.mxu0 0.0
        %1366 = vmatpush.msra.mxu0 0.0
        %1367 = vmatpush.msra.mxu0 0.0
        %1368 = vmatpush.msra.mxu0 0.0
        %1369 = vmatpush.msra.mxu0 0.0
        %1370 = vmatpush.msra.mxu0 0.0
        %1371 = vmatpush.msra.mxu0 0.0
        %1372 = vmatpush.msra.mxu0 0.0
        %1373 = vmatpush.msra.mxu0 0.0
        %1374 = vmatpush.msra.mxu0 0.0
        %1375 = vmatpush.msra.mxu0 %v1355
        %1376 = vmatmul.f32.gmra.mxu0 %v1358
        %v1377 = vpop.f32.mrf.mxu0
        %v1378 = vadd.f32 0.0, %v1377
        %1379 = vdwg.mxu0
        %1380 = vrot.lane.b32.xlu0 %v1298, 120
        %v1381 = vpop.permute.xlu0 %1380
        %1382 = vrot.lane.b32.xlu0 %v1298, 88
        %v1383 = vpop.permute.xlu0 %1382
        %v1384 = vsel %vm722, %v1381, 0
        %v1386 = vsel %vm722, %v1383, 0
        %1388 = vmatpush.xpose.msra.mxu0 0.0
        %1389 = vmatpush.xpose.msra.mxu0 0.0
        %1390 = vmatpush.xpose.msra.mxu0 0.0
        %1391 = vmatpush.xpose.msra.mxu0 0.0
        %1392 = vmatpush.xpose.msra.mxu0 0.0
        %1393 = vmatpush.xpose.msra.mxu0 0.0
        %1394 = vmatpush.xpose.msra.mxu0 0.0
        %1395 = vmatpush.xpose.msra.mxu0 0.0
        %1396 = vmatpush.xpose.msra.mxu0 0.0
        %1397 = vmatpush.xpose.msra.mxu0 0.0
        %1398 = vmatpush.xpose.msra.mxu0 0.0
        %1399 = vmatpush.xpose.msra.mxu0 0.0
        %1400 = vmatpush.xpose.msra.mxu0 0.0
        %1401 = vmatpush.xpose.msra.mxu0 0.0
        %1402 = vmatpush.xpose.msra.mxu0 0.0
        %1403 = vmatpush.xpose.msra.mxu0 %v1386
        %1404 = vmatmul.f32.gmra.mxu0 %v1384
        %v1405 = vpop.f32.mrf.mxu0
        %v1406 = vadd.f32 0.0, %v1405
        %1407 = vdwg.mxu0
        %v1408 = vmul.f32 %v1406, 0.35355338
        %v1409 = vadd.f32 %v1408, %v749
        %v1410 = vsel %vm722, %v1409, -inf
        %1411 = vmax.xlane.f32.xlu0 %v1410
        %v1412 = vpop.xlane.xlu0 %1411
        %v1413 = vsub.f32 %v1409, %v1412
        %v1414 = vmul.f32 %v1413, 1.442695
        %v1415 = vpow.pop %v1414
        %v1416 = vsel %vm722, %v1415, 0.0
        %1417 = vadd.xlane.f32.xlu0 %v1416
        %v1418 = vpop.xlane.xlu0 %1417
        %v1419 = vrcp.pop %v1418
        %v1420 = vmul.f32 %v1418, %v1419
        %v1421 = vsub.f32 1.0, %v1420
        %v1422 = vmul.f32 %v1419, %v1421
        %v1423 = vadd.f32 %v1419, %v1422
        %vm1424 = vweird.f32 %v1418
        %vm1425 = vweird.f32 %v1419
        %vm1426 = vmor %vm1424, %vm1425
        %v1427 = vsel %vm1426, %v1419, %v1423
        %v1428 = vand.u32 2147483647, %v1418
        %vm1429 = vcmp.eq.f32.partialorder %v1428, 8.507059e+37
        %v1430 = vand.u32 %v1418, 2147483648
        %v1431 = vor.u32 1.1754944e-38, %v1430
        %v1432 = vsel %vm1429, %v1431, %v1427
        %v1433 = vmul.f32 %v1415, %v1432
        %1434 = vrot.lane.b32.xlu0 %v1298, 56
        %v1435 = vpop.permute.xlu0 %1434
        %v1438 = vsel %vm722, %v1433, 0
        %1440 = vmatpush.msra.mxu0 0.0
        %1441 = vmatpush.msra.mxu0 0.0
        %1442 = vmatpush.msra.mxu0 0.0
        %1443 = vmatpush.msra.mxu0 0.0
        %1444 = vmatpush.msra.mxu0 0.0
        %1445 = vmatpush.msra.mxu0 0.0
        %1446 = vmatpush.msra.mxu0 0.0
        %1447 = vmatpush.msra.mxu0 0.0
        %1448 = vmatpush.msra.mxu0 0.0
        %1449 = vmatpush.msra.mxu0 0.0
        %1450 = vmatpush.msra.mxu0 0.0
        %1451 = vmatpush.msra.mxu0 0.0
        %1452 = vmatpush.msra.mxu0 0.0
        %1453 = vmatpush.msra.mxu0 0.0
        %1454 = vmatpush.msra.mxu0 0.0
        %1455 = vmatpush.msra.mxu0 %v1435
        %1456 = vmatmul.f32.gmra.mxu0 %v1438
        %v1457 = vpop.f32.mrf.mxu0
        %v1458 = vadd.f32 0.0, %v1457
        %1459 = vdwg.mxu0
        %1460 = vrot.lane.b32.xlu0 %v1298, 112
        %v1461 = vpop.permute.xlu0 %1460
        %1462 = vrot.lane.b32.xlu0 %v1298, 80
        %v1463 = vpop.permute.xlu0 %1462
        %v1464 = vsel %vm722, %v1461, 0
        %v1466 = vsel %vm722, %v1463, 0
        %1468 = vmatpush.xpose.msra.mxu0 0.0
        %1469 = vmatpush.xpose.msra.mxu0 0.0
        %1470 = vmatpush.xpose.msra.mxu0 0.0
        %1471 = vmatpush.xpose.msra.mxu0 0.0
        %1472 = vmatpush.xpose.msra.mxu0 0.0
        %1473 = vmatpush.xpose.msra.mxu0 0.0
        %1474 = vmatpush.xpose.msra.mxu0 0.0
        %1475 = vmatpush.xpose.msra.mxu0 0.0
        %1476 = vmatpush.xpose.msra.mxu0 0.0
        %1477 = vmatpush.xpose.msra.mxu0 0.0
        %1478 = vmatpush.xpose.msra.mxu0 0.0
        %1479 = vmatpush.xpose.msra.mxu0 0.0
        %1480 = vmatpush.xpose.msra.mxu0 0.0
        %1481 = vmatpush.xpose.msra.mxu0 0.0
        %1482 = vmatpush.xpose.msra.mxu0 0.0
        %1483 = vmatpush.xpose.msra.mxu0 %v1466
        %1484 = vmatmul.f32.gmra.mxu0 %v1464
        %v1485 = vpop.f32.mrf.mxu0
        %v1486 = vadd.f32 0.0, %v1485
        %1487 = vdwg.mxu0
        %v1488 = vmul.f32 %v1486, 0.35355338
        %v1489 = vadd.f32 %v1488, %v749
        %v1490 = vsel %vm722, %v1489, -inf
        %1491 = vmax.xlane.f32.xlu0 %v1490
        %v1492 = vpop.xlane.xlu0 %1491
        %v1493 = vsub.f32 %v1489, %v1492
        %v1494 = vmul.f32 %v1493, 1.442695
        %v1495 = vpow.pop %v1494
        %v1496 = vsel %vm722, %v1495, 0.0
        %1497 = vadd.xlane.f32.xlu0 %v1496
        %v1498 = vpop.xlane.xlu0 %1497
        %v1499 = vrcp.pop %v1498
        %v1500 = vmul.f32 %v1498, %v1499
        %v1501 = vsub.f32 1.0, %v1500
        %v1502 = vmul.f32 %v1499, %v1501
        %v1503 = vadd.f32 %v1499, %v1502
        %vm1504 = vweird.f32 %v1498
        %vm1505 = vweird.f32 %v1499
        %vm1506 = vmor %vm1504, %vm1505
        %v1507 = vsel %vm1506, %v1499, %v1503
        %v1508 = vand.u32 2147483647, %v1498
        %vm1509 = vcmp.eq.f32.partialorder %v1508, 8.507059e+37
        %v1510 = vand.u32 %v1498, 2147483648
        %v1511 = vor.u32 1.1754944e-38, %v1510
        %v1512 = vsel %vm1509, %v1511, %v1507
        %v1513 = vmul.f32 %v1495, %v1512
        %1514 = vrot.lane.b32.xlu0 %v1298, 48
        %v1515 = vpop.permute.xlu0 %1514
        %v1518 = vsel %vm722, %v1513, 0
        %1520 = vmatpush.msra.mxu0 0.0
        %1521 = vmatpush.msra.mxu0 0.0
        %1522 = vmatpush.msra.mxu0 0.0
        %1523 = vmatpush.msra.mxu0 0.0
        %1524 = vmatpush.msra.mxu0 0.0
        %1525 = vmatpush.msra.mxu0 0.0
        %1526 = vmatpush.msra.mxu0 0.0
        %1527 = vmatpush.msra.mxu0 0.0
        %1528 = vmatpush.msra.mxu0 0.0
        %1529 = vmatpush.msra.mxu0 0.0
        %1530 = vmatpush.msra.mxu0 0.0
        %1531 = vmatpush.msra.mxu0 0.0
        %1532 = vmatpush.msra.mxu0 0.0
        %1533 = vmatpush.msra.mxu0 0.0
        %1534 = vmatpush.msra.mxu0 0.0
        %1535 = vmatpush.msra.mxu0 %v1515
        %1536 = vmatmul.f32.gmra.mxu0 %v1518
        %v1537 = vpop.f32.mrf.mxu0
        %v1538 = vadd.f32 0.0, %v1537
        %1539 = vdwg.mxu0
        %1540 = vrot.lane.b32.xlu0 %v1298, 104
        %v1541 = vpop.permute.xlu0 %1540
        %1542 = vrot.lane.b32.xlu0 %v1298, 72
        %v1543 = vpop.permute.xlu0 %1542
        %v1544 = vsel %vm722, %v1541, 0
        %v1546 = vsel %vm722, %v1543, 0
        %1548 = vmatpush.xpose.msra.mxu0 0.0
        %1549 = vmatpush.xpose.msra.mxu0 0.0
        %1550 = vmatpush.xpose.msra.mxu0 0.0
        %1551 = vmatpush.xpose.msra.mxu0 0.0
        %1552 = vmatpush.xpose.msra.mxu0 0.0
        %1553 = vmatpush.xpose.msra.mxu0 0.0
        %1554 = vmatpush.xpose.msra.mxu0 0.0
        %1555 = vmatpush.xpose.msra.mxu0 0.0
        %1556 = vmatpush.xpose.msra.mxu0 0.0
        %1557 = vmatpush.xpose.msra.mxu0 0.0
        %1558 = vmatpush.xpose.msra.mxu0 0.0
        %1559 = vmatpush.xpose.msra.mxu0 0.0
        %1560 = vmatpush.xpose.msra.mxu0 0.0
        %1561 = vmatpush.xpose.msra.mxu0 0.0
        %1562 = vmatpush.xpose.msra.mxu0 0.0
        %1563 = vmatpush.xpose.msra.mxu0 %v1546
        %1564 = vmatmul.f32.gmra.mxu0 %v1544
        %v1565 = vpop.f32.mrf.mxu0
        %v1566 = vadd.f32 0.0, %v1565
        %1567 = vdwg.mxu0
        %v1568 = vmul.f32 %v1566, 0.35355338
        %v1569 = vadd.f32 %v1568, %v749
        %v1570 = vsel %vm722, %v1569, -inf
        %1571 = vmax.xlane.f32.xlu0 %v1570
        %v1572 = vpop.xlane.xlu0 %1571
        %v1573 = vsub.f32 %v1569, %v1572
        %v1574 = vmul.f32 %v1573, 1.442695
        %v1575 = vpow.pop %v1574
        %v1576 = vsel %vm722, %v1575, 0.0
        %1577 = vadd.xlane.f32.xlu0 %v1576
        %v1578 = vpop.xlane.xlu0 %1577
        %v1579 = vrcp.pop %v1578
        %v1580 = vmul.f32 %v1578, %v1579
        %v1581 = vsub.f32 1.0, %v1580
        %v1582 = vmul.f32 %v1579, %v1581
        %v1583 = vadd.f32 %v1579, %v1582
        %vm1584 = vweird.f32 %v1578
        %vm1585 = vweird.f32 %v1579
        %vm1586 = vmor %vm1584, %vm1585
        %v1587 = vsel %vm1586, %v1579, %v1583
        %v1588 = vand.u32 2147483647, %v1578
        %vm1589 = vcmp.eq.f32.partialorder %v1588, 8.507059e+37
        %v1590 = vand.u32 %v1578, 2147483648
        %v1591 = vor.u32 1.1754944e-38, %v1590
        %v1592 = vsel %vm1589, %v1591, %v1587
        %v1593 = vmul.f32 %v1575, %v1592
        %1594 = vrot.lane.b32.xlu0 %v1298, 40
        %v1595 = vpop.permute.xlu0 %1594
        %v1598 = vsel %vm722, %v1593, 0
        %1600 = vmatpush.msra.mxu0 0.0
        %1601 = vmatpush.msra.mxu0 0.0
        %1602 = vmatpush.msra.mxu0 0.0
        %1603 = vmatpush.msra.mxu0 0.0
        %1604 = vmatpush.msra.mxu0 0.0
        %1605 = vmatpush.msra.mxu0 0.0
        %1606 = vmatpush.msra.mxu0 0.0
        %1607 = vmatpush.msra.mxu0 0.0
        %1608 = vmatpush.msra.mxu0 0.0
        %1609 = vmatpush.msra.mxu0 0.0
        %1610 = vmatpush.msra.mxu0 0.0
        %1611 = vmatpush.msra.mxu0 0.0
        %1612 = vmatpush.msra.mxu0 0.0
        %1613 = vmatpush.msra.mxu0 0.0
        %1614 = vmatpush.msra.mxu0 0.0
        %1615 = vmatpush.msra.mxu0 %v1595
        %1616 = vmatmul.f32.gmra.mxu0 %v1598
        %v1617 = vpop.f32.mrf.mxu0
        %v1618 = vadd.f32 0.0, %v1617
        %1619 = vdwg.mxu0
        %1621 = vrot.lane.b32.xlu0 %v1458, 8
        %v1622 = vpop.permute.xlu0 %1621
        %1625 = vrot.lane.b32.xlu0 %v1538, 16
        %v1626 = vpop.permute.xlu0 %1625
        %1629 = vrot.lane.b32.xlu0 %v1618, 24
        %v1630 = vpop.permute.xlu0 %1629
        %v1632 = vsel %vm722, %v1378, %v1622
        %v1633 = vsel %vm1055, %v1632, %v1626
        %v1634 = vsel %vm1057, %v1633, %v1630
        %s1635 = scalar_lea.vmem %s6, 16
        %v1636 = vld [vmem:[%s1635] sm:$0xf]
        %v1637 = vld [vmem:[%s1635 + $0x4] sm:$0xf]
        %v1638 = vld [vmem:[%s1635 + $0x8] sm:$0xf]
        %v1639 = vld [vmem:[%s1635 + $0xc] sm:$0xf]
        %s1640 = scalar_lea.vmem %s7, 1
        %v1641 = vld [vmem:[%s1640] sm:$0x1]
        %v1642 = vpack.c.bf16 %v1634, %v1634
        %v1644 = vperm.slane %v1641, 0
        %v1650 = vunpack.c.l.b16 %v1636
        %v1651 = vunpack.c.l.b16 %v1637
        %v1652 = vunpack.c.l.b16 %v1638
        %v1653 = vunpack.c.l.b16 %v1639
        %v1654 = vpack.c.b16 %v1651, %v1650
        %v1655 = vpack.c.b16 %v1653, %v1652
        %v1659 = vsel %vm644, %v1642, 0
        %1661 = vmatpush.bf16.msra.mxu0 0
        %1662 = vmatpush.bf16.msra.mxu0 0
        %1663 = vmatpush.bf16.msra.mxu0 0
        %1664 = vmatpush.bf16.msra.mxu0 0
        %1665 = vmatpush.bf16.msra.mxu0 0
        %1666 = vmatpush.bf16.msra.mxu0 0
        %1667 = vmatpush.bf16.msra.mxu0 %v1655
        %1668 = vmatpush.bf16.msra.mxu0 %v1654
        %1669 = vmatmul.bf16.gmra.mxu0 %v1659
        %v1670 = vpop.f32.mrf.mxu0
        %v1671 = vadd.f32 %v1644, %v1670
        %v1672 = vpop.f32.mrf.mxu0
        %1673 = vdwg.mxu0
        %v1674 = vadd.f32 %v1671, %v1261
        %s1675 = scalar_lea.vmem %s8, 1
        %v1676 = vld [vmem:[%s1675] sm:$0x1]
        %s1677 = scalar_lea.vmem %s9, 1
        %v1678 = vld [vmem:[%s1677] sm:$0x1]
        %v1679 = vsel %vm644, %v1674, 0.0
        %1680 = vadd.xlane.f32.xlu0 %v1679
        %v1681 = vpop.xlane.xlu0 %1680
        %v1682 = vmul.f32 %v1681, %v654
        %v1683 = vsub.f32 %v1674, %v1682
        %v1684 = vmul.f32 %v1683, %v1683
        %v1685 = vsel %vm644, %v1684, 0.0
        %1686 = vadd.xlane.f32.xlu0 %v1685
        %v1687 = vpop.xlane.xlu0 %1686
        %v1688 = vmul.f32 %v1687, %v654
        %v1689 = vadd.f32 %v1688, 1e-05
        %v1690 = vrsqrt.pop %v1689
        %v1691 = vmul.f32 %v1690, %v1689
        %v1692 = vmul.f32 %v1691, %v1690
        %v1693 = vmul.f32 0.5, %v1692
        %v1694 = vsub.f32 1.5, %v1693
        %v1695 = vmul.f32 %v1690, %v1694
        %vm1696 = vweird.f32 %v1689
        %vm1697 = vweird.f32 %v1690
        %vm1698 = vmor %vm1696, %vm1697
        %v1699 = vsel %vm1698, %v1690, %v1695
        %v1700 = vmul.f32 %v1683, %v1699
        %v1702 = vperm.slane %v1676, 0
        %v1704 = vmul.f32 %v1700, %v1702
        %v1706 = vperm.slane %v1678, 0
        %v1708 = vadd.f32 %v1704, %v1706
        %s1709 = scalar_lea.vmem %s10, 16
        %v1710 = vld [vmem:[%s1709] sm:$0xf]
        %v1711 = vld [vmem:[%s1709 + $0x4] sm:$0xf]
        %v1712 = vld [vmem:[%s1709 + $0x8] sm:$0xf]
        %v1713 = vld [vmem:[%s1709 + $0xc] sm:$0xf]
        %s1714 = scalar_lea.vmem %s11, 1
        %v1715 = vld [vmem:[%s1714] sm:$0x1]
        %v1716 = vpack.c.bf16 %v1708, %v1708
        %v1718 = vperm.slane %v1715, 0
        %v1724 = vunpack.c.l.b16 %v1710
        %v1725 = vunpack.c.l.b16 %v1711
        %v1726 = vunpack.c.l.b16 %v1712
        %v1727 = vunpack.c.l.b16 %v1713
        %v1728 = vpack.c.b16 %v1725, %v1724
        %v1729 = vpack.c.b16 %v1727, %v1726
        %v1733 = vsel %vm644, %v1716, 0
        %1735 = vmatpush.bf16.msra.mxu0 0
        %1736 = vmatpush.bf16.msra.mxu0 0
        %1737 = vmatpush.bf16.msra.mxu0 0
        %1738 = vmatpush.bf16.msra.mxu0 0
        %1739 = vmatpush.bf16.msra.mxu0 0
        %1740 = vmatpush.bf16.msra.mxu0 0
        %1741 = vmatpush.bf16.msra.mxu0 %v1729
        %1742 = vmatpush.bf16.msra.mxu0 %v1728
        %1743 = vmatmul.bf16.gmra.mxu0 %v1733
        %v1744 = vpop.f32.mrf.mxu0
        %v1745 = vadd.f32 %v1718, %v1744
        %v1746 = vpop.f32.mrf.mxu0
        %1747 = vdwg.mxu0
        %v1748 = vmul.f32 %v1745, %v1745
        %v1749 = vmul.f32 %v1745, %v1748
        %v1750 = vmul.f32 %v1749, 0.044715
        %v1751 = vadd.f32 %v1745, %v1750
        %v1752 = vmul.f32 %v1751, 0.7978846
        %v1753 = vtanh.pop %v1752
        %v1754 = vadd.f32 %v1753, 1.0
        %v1755 = vmul.f32 %v1754, 0.5
        %v1756 = vmul.f32 %v1745, %v1755
        %s1757 = scalar_lea.vmem %s12, 32
        %v1758 = vld [vmem:[%s1757] sm:$0xf]
        %v1759 = vld [vmem:[%s1757 + $0x4] sm:$0xf]
        %v1760 = vld [vmem:[%s1757 + $0x8] sm:$0xf]
        %v1761 = vld [vmem:[%s1757 + $0xc] sm:$0xf]
        %v1762 = vld [vmem:[%s1757 + $0x10] sm:$0xf]
        %v1763 = vld [vmem:[%s1757 + $0x14] sm:$0xf]
        %v1764 = vld [vmem:[%s1757 + $0x18] sm:$0xf]
        %v1765 = vld [vmem:[%s1757 + $0x1c] sm:$0xf]
        %s1766 = scalar_lea.vmem %s13, 1
        %v1767 = vld [vmem:[%s1766] sm:$0x1]
        %v1768 = vpack.c.bf16 %v1756, %v1756
        %v1770 = vperm.slane %v1767, 0
        %v1780 = vunpack.c.l.b16 %v1758
        %v1781 = vunpack.c.l.b16 %v1759
        %v1782 = vunpack.c.l.b16 %v1760
        %v1783 = vunpack.c.l.b16 %v1761
        %v1784 = vunpack.c.l.b16 %v1762
        %v1785 = vunpack.c.l.b16 %v1763
        %v1786 = vunpack.c.l.b16 %v1764
        %v1787 = vunpack.c.l.b16 %v1765
        %v1788 = vpack.c.b16 %v1781, %v1780
        %v1789 = vpack.c.b16 %v1783, %v1782
        %v1790 = vpack.c.b16 %v1785, %v1784
        %v1791 = vpack.c.b16 %v1787, %v1786
        %v1797 = vsel %vm1212, %v1768, 0
        %1799 = vmatpush.bf16.msra.mxu0 0
        %1800 = vmatpush.bf16.msra.mxu0 0
        %1801 = vmatpush.bf16.msra.mxu0 0
        %1802 = vmatpush.bf16.msra.mxu0 0
        %1803 = vmatpush.bf16.msra.mxu0 %v1791
        %1804 = vmatpush.bf16.msra.mxu0 %v1790
        %1805 = vmatpush.bf16.msra.mxu0 %v1789
        %1806 = vmatpush.bf16.msra.mxu0 %v1788
        %1807 = vmatmul.bf16.gmra.mxu0 %v1797
        %v1808 = vpop.f32.mrf.mxu0
        %v1809 = vadd.f32 %v1770, %v1808
        %v1810 = vpop.f32.mrf.mxu0
        %1811 = vdwg.mxu0
        %v1812 = vadd.f32 %v1809, %v1708
        %s1813 = scalar_lea.vmem %s14, 1
        %v1814 = vld [vmem:[%s1813] sm:$0x1]
        %s1815 = scalar_lea.vmem %s15, 1
        %v1816 = vld [vmem:[%s1815] sm:$0x1]
        %v1817 = vsel %vm644, %v1812, 0.0
        %1818 = vadd.xlane.f32.xlu0 %v1817
        %v1819 = vpop.xlane.xlu0 %1818
        %v1820 = vmul.f32 %v1819, %v654
        %v1821 = vsub.f32 %v1812, %v1820
        %v1822 = vmul.f32 %v1821, %v1821
        %v1823 = vsel %vm644, %v1822, 0.0
        %1824 = vadd.xlane.f32.xlu0 %v1823
        %v1825 = vpop.xlane.xlu0 %1824
        %v1826 = vmul.f32 %v1825, %v654
        %v1827 = vadd.f32 %v1826, 1e-05
        %v1828 = vrsqrt.pop %v1827
        %v1829 = vmul.f32 %v1828, %v1827
        %v1830 = vmul.f32 %v1829, %v1828
        %v1831 = vmul.f32 0.5, %v1830
        %v1832 = vsub.f32 1.5, %v1831
        %v1833 = vmul.f32 %v1828, %v1832
        %vm1834 = vweird.f32 %v1827
        %vm1835 = vweird.f32 %v1828
        %vm1836 = vmor %vm1834, %vm1835
        %v1837 = vsel %vm1836, %v1828, %v1833
        %v1838 = vmul.f32 %v1821, %v1837
        %v1840 = vperm.slane %v1814, 0
        %v1842 = vmul.f32 %v1838, %v1840
        %v1844 = vperm.slane %v1816, 0
        %v1846 = vadd.f32 %v1842, %v1844
        %v1847 = vld [vmem:[%s16] sm:$0xf]
        %v1848 = vld [vmem:[%s16 + $0x4] sm:$0xf]
        %v1849 = vld [vmem:[%s16 + $0x8] sm:$0xf]
        %v1850 = vld [vmem:[%s16 + $0xc] sm:$0xf]
        %v1851 = vld [vmem:[%s17] sm:$0x1]
        %v1852 = vpack.c.bf16 %v1846, %v1846
        %v1857 = vunpack.c.l.b16 %v1847
        %v1858 = vunpack.c.l.b16 %v1848
        %v1859 = vunpack.c.l.b16 %v1849
        %v1860 = vunpack.c.l.b16 %v1850
        %v1861 = vpack.c.b16 %v1858, %v1857
        %v1862 = vpack.c.b16 %v1860, %v1859
        %v1866 = vsel %vm644, %v1852, 0
        %1868 = vmatpush.bf16.msra.mxu0 0
        %1869 = vmatpush.bf16.msra.mxu0 0
        %1870 = vmatpush.bf16.msra.mxu0 0
        %1871 = vmatpush.bf16.msra.mxu0 0
        %1872 = vmatpush.bf16.msra.mxu0 0
        %1873 = vmatpush.bf16.msra.mxu0 0
        %1874 = vmatpush.bf16.msra.mxu0 %v1862
        %1875 = vmatpush.bf16.msra.mxu0 %v1861
        %1876 = vmatmul.bf16.gmra.mxu0 %v1866
        %v1877 = vpop.f32.mrf.mxu0
        %v1878 = vadd.f32 %v1851, %v1877
        %v1879 = vpop.f32.mrf.mxu0
        %1880 = vdwg.mxu0
        %v1881 = vtanh.pop %v1878
        %v1882 = vld [vmem:[%s18] sm:$0xf]
        %v1883 = vld [vmem:[%s18 + $0x4] sm:$0xf]
        %v1884 = vld [vmem:[%s18 + $0x8] sm:$0xf]
        %v1885 = vld [vmem:[%s18 + $0xc] sm:$0xf]
        %v1886 = vld [vmem:[%s19] sm:$0x1]
        %v1887 = vpack.c.bf16 %v1881, %v1881
        %v1892 = vunpack.c.l.b16 %v1882
        %v1893 = vunpack.c.l.b16 %v1883
        %v1894 = vunpack.c.l.b16 %v1884
        %v1895 = vunpack.c.l.b16 %v1885
        %v1896 = vpack.c.b16 %v1893, %v1892
        %v1897 = vpack.c.b16 %v1895, %v1894
        %v1901 = vsel %vm644, %v1887, 0
        %1903 = vmatpush.bf16.msra.mxu0 0
        %1904 = vmatpush.bf16.msra.mxu0 0
        %1905 = vmatpush.bf16.msra.mxu0 0
        %1906 = vmatpush.bf16.msra.mxu0 0
        %1907 = vmatpush.bf16.msra.mxu0 0
        %1908 = vmatpush.bf16.msra.mxu0 0
        %1909 = vmatpush.bf16.msra.mxu0 %v1897
        %1910 = vmatpush.bf16.msra.mxu0 %v1896
        %1911 = vmatmul.bf16.gmra.mxu0 %v1901
        %v1912 = vpop.f32.mrf.mxu0
        %v1913 = vadd.f32 %v1886, %v1912
        %v1914 = vpop.f32.mrf.mxu0
        %1915 = vdwg.mxu0
        %1916 = vst [vmem:[%s630] sm:$0x1] %v1913
        %s1917 = sand.u32 %s472, 1
        %s1918 = scalar_lea.sflag [#allocation3], %s1917
        %s1919 = sand.u32 %s472, 1
        %s1920 = scalar_lea.vmem [#allocation2], %s1919
        // Predicated region
        $region101: #{_lambda_.1} parent=99 // pred_check
          %p1921 = pneg %p482
        $region102: #{_lambda_.1} parent=99 // pred_check_branch
          %1923 = sbr.rel (%p1921) target = $region104
        $region103: #{_lambda_.1} parent=99 // pred_region
          %1925 = vsyncadd %s1918, 0
          %s1926 = scalar_lea.hbm %s20, %s34
          %s1928 = sshll.u32 %s1920, 4
          %s1929 = int_to_ptr.vmem [resolvable:$true] %s1928
          %s1930 = sshll.u32 %s1926, 4
          %s1931 = int_to_ptr.hbm [resolvable:$true] %s1930
          %1933 = dma.vmem_to_hbm [thread:$0]  %s1929, 16, %s1931, %s1918
        $region104: #{_lambda_.1} parent=99 // pred_fallthru
          _
      $region100: #{_lambda_.1} parent=5 // pred_fallthru
        _
      %p1934 = scmp.le.s32.totalorder 2, %s29
      // Predicated region
      $region105: #{_lambda_.1} parent=5 // pred_check
        %p1935 = pneg %p1934
      $region106: #{_lambda_.1} parent=5 // pred_check_branch
        %1937 = sbr.rel (%p1935) target = $region108
      $region107: #{_lambda_.1} parent=5 // pred_region
        %s1938 = ssub.s32 %s29, 2
        // Predicated region
        $region109: #{_lambda_.1} parent=107 // pred_check
          %p1939 = pneg %p488
        $region110: #{_lambda_.1} parent=107 // pred_check_branch
          %1941 = sbr.rel (%p1939) target = $region112
        $region111: #{_lambda_.1} parent=107 // pred_region
          %s1942 = sand.u32 %s473, 1
          %s1943 = scalar_lea.sflag [#allocation3], %s1942
          %s1944 = sand.u32 %s473, 1
          %s1945 = scalar_lea.vmem [#allocation2], %s1944
          %1947 = dma.done %s1943, 16
        $region112: #{_lambda_.1} parent=107 // pred_fallthru
          _
      $region108: #{_lambda_.1} parent=5 // pred_fallthru
        _
    $region6: #{_lambda_.1} parent=1 // loop_footer
      %s33 = sadd.s32 1, %s29
    $region7: #{_lambda_.1} parent=1 // loop_footer_branch
      %28 = sbr.rel target = $region3
    $region8: #{_lambda_.1} parent=1 // loop_exit
      _
    %1948 = vsyncpa [#allocation3], 1
    %s1949 = scalar_lea.sflag [#allocation3], 1
    %1950 = vsyncpa %s1949, 1

</llo_original>
